<compile_context>
chip_gen: v7x
topology: tpu7x:2x2x1
jax: 0.10.0
libtpu: 0.0.40
codegen_flags: <defaults>
</compile_context>

<pallas_src>
import functools

import jax
import jax.numpy as jnp
from jax import lax
from jax.experimental import pallas as pl
from jax.experimental.pallas import tpu as pltpu


# ----------------------------------------------------------------------------
# Encoder: fused trunk matmul (+relu) + replaced inception.fc (+ Encoder_'s relu;
# dropout = identity).  Grid = batch tiles ("parallel"); weights resident.
# ----------------------------------------------------------------------------
def encoder_kernel(x_ref, wt_ref, bt_ref, wfc_ref, bfc_ref, out_ref):
    feat = jnp.dot(x_ref[...], wt_ref[...],
                   preferred_element_type=jnp.float32) + bt_ref[...]
    feat = jnp.maximum(feat, 0.0)                       # trunk relu (stand-in)
    emb = jnp.dot(feat.astype(jnp.bfloat16), wfc_ref[...],
                  preferred_element_type=jnp.float32) + bfc_ref[...]
    out_ref[...] = jnp.maximum(emb, 0.0)                # Encoder_'s relu (dropout = id)


def encoder_forward(images, w_trunk, b_trunk, w_fc, b_fc, *, tb=8):
    B = images.shape[0]
    x = images.reshape(B, -1).astype(jnp.bfloat16)      # bf16 matmul operand
    K = x.shape[1]
    F = w_trunk.shape[1]
    E = w_fc.shape[1]
    tb = min(tb, B)
    assert B % tb == 0
    # NOTE: at real inception scale (huge K, F=2048) re-introduce a K-tiled reduction
    # grid with a VMEM f32 accumulator and set
    # pltpu.CompilerParams(vmem_limit_bytes=...) so double-buffered (tk, F) bf16
    # weight tiles fit v7x's 64 MiB (32 MiB scoped) / v5e's 16 MiB scoped VMEM.
    return pl.pallas_call(
        encoder_kernel,
        out_shape=jax.ShapeDtypeStruct((B, E), jnp.float32),
        grid_spec=pltpu.PrefetchScalarGridSpec(
            num_scalar_prefetch=0,
            grid=(B // tb,),
            in_specs=[
                pl.BlockSpec((tb, K), lambda i: (i, 0)),
                pl.BlockSpec((K, F), lambda i: (0, 0)),
                pl.BlockSpec((1, F), lambda i: (0, 0)),
                pl.BlockSpec((F, E), lambda i: (0, 0)),
                pl.BlockSpec((1, E), lambda i: (0, 0)),
            ],
            out_specs=pl.BlockSpec((tb, E), lambda i: (i, 0)),
        ),
        compiler_params=pltpu.CompilerParams(
            dimension_semantics=("parallel",)),
    )(x, w_trunk, b_trunk, w_fc, b_fc)


# ----------------------------------------------------------------------------
# Multi-layer LSTM with in-kernel time loop.
# Grid = (batch tiles,) "parallel".  Token ids are scalar-prefetched into SMEM and
# drive an in-kernel gather from the VMEM-resident embedding table into a layer-0
# input slab whose row 0 is the encoder features.  (h, c) live in VMEM scratch.
# Emits the hidden-state slab (bf16); the vocab projection is a separate matmul.
# ----------------------------------------------------------------------------
def lstm_kernel(num_layers, ids_ref, feat_ref, table_ref, w_ref, b_ref,
                hid_ref, x_sc, h_sc, c_sc):
    L = num_layers
    T1, tb, H = hid_ref.shape
    T = T1 - 1
    b_off = pl.program_id(0) * tb

    # --- Build the layer-0 input slab: row 0 = features, rows 1..T = embeddings. ---
    x_sc[0] = feat_ref[...]
    # TODO(synk): static unroll is fine at toy T*tb; switch to a fori_loop / DMA
    #             gather (and a bf16 table) at real caption length, batch and vocab.
    for t in range(T):
        for b in range(tb):
            tok = ids_ref[t, b_off + b]                        # SMEM scalar read
            x_sc[t + 1, b:b + 1, :] = table_ref[pl.ds(tok, 1), :]

    h_sc[...] = jnp.zeros_like(h_sc)
    c_sc[...] = jnp.zeros_like(c_sc)

    # Hoisted loop invariants (JAX does not CSE broadcast_in_dim inside the loop).
    biases = [jnp.broadcast_to(b_ref[l], (tb, 4 * H)) for l in range(L)]

    def sigmoid(x):
        # sigmoid(x) = 0.5*(1 + tanh(0.5*x)) -> single EUP push (no exp + reciprocal).
        return 0.5 * (1.0 + jnp.tanh(0.5 * x))

    def step(t, carry):
        inp = x_sc[t]                                          # [tb, E] f32
        for l in range(L):
            # Merged gate matmul: [inp ‖ h_{l}] @ [W_ih; W_hh]  (one K=E+H MXU pass).
            cat = jnp.concatenate([inp, h_sc[l]], axis=-1).astype(jnp.bfloat16)
            gates = jnp.dot(cat, w_ref[l],
                            preferred_element_type=jnp.float32) + biases[l]
            # PyTorch gate order i, f, g, o; H multiple of 128 -> lane-aligned slices.
            i_g = sigmoid(gates[:, 0 * H:1 * H])
            f_g = sigmoid(gates[:, 1 * H:2 * H])
            g_g = jnp.tanh(gates[:, 2 * H:3 * H])
            o_g = sigmoid(gates[:, 3 * H:4 * H])
            c_new = f_g * c_sc[l] + i_g * g_g
            h_new = o_g * jnp.tanh(c_new)
            h_sc[l] = h_new
            c_sc[l] = c_new
            inp = h_new
        hid_ref[t] = inp.astype(jnp.bfloat16)                  # [tb, H] store
        return carry

    lax.fori_loop(0, T1, step, 0, unroll=True)


def lstm_forward(features, captions, embed_table, w_lstm, b_lstm, num_layers, *, tb=8):
    T, B = captions.shape
    V, E = embed_table.shape
    H = w_lstm.shape[2] // 4
    T1 = T + 1
    tb = min(tb, B)
    assert B % tb == 0
    # Clamp ids: an out-of-range token would otherwise silently read a wrong row.
    ids = jnp.clip(captions.astype(jnp.int32), 0, V - 1)
    kernel = functools.partial(lstm_kernel, num_layers)
    return pl.pallas_call(
        kernel,
        out_shape=jax.ShapeDtypeStruct((T1, B, H), jnp.bfloat16),
        grid_spec=pltpu.PrefetchScalarGridSpec(
            num_scalar_prefetch=1,                     # ids -> SMEM
            grid=(B // tb,),
            in_specs=[
                pl.BlockSpec((tb, E), lambda b, ids_s: (b, 0)),          # features
                pl.BlockSpec((V, E), lambda b, ids_s: (0, 0)),           # embed table (resident)
                pl.BlockSpec(w_lstm.shape, lambda b, ids_s: (0, 0, 0)),  # merged weights
                pl.BlockSpec(b_lstm.shape, lambda b, ids_s: (0, 0, 0)),  # biases
            ],
            out_specs=pl.BlockSpec((T1, tb, H), lambda b, ids_s: (0, b, 0)),
            scratch_shapes=[
                pltpu.VMEM((T1, tb, E), jnp.float32),          # layer-0 input slab
                pltpu.VMEM((num_layers, tb, H), jnp.float32),  # h per layer
                pltpu.VMEM((num_layers, tb, H), jnp.float32),  # c per layer
            ],
        ),
        compiler_params=pltpu.CompilerParams(
            dimension_semantics=("parallel",)),
    )(ids, features, embed_table, w_lstm, b_lstm)


# ----------------------------------------------------------------------------
# Output projection: [(T+1)*B, H] @ [H, V] with 256-lane vocab tiles (unmasked,
# wide vst) and >= 2 parallel M tiles so v7x can split across TensorCores.
# ----------------------------------------------------------------------------
def proj_kernel(h_ref, w_ref, b_ref, o_ref):
    o_ref[...] = (jnp.dot(h_ref[...], w_ref[...],
                          preferred_element_type=jnp.float32) + b_ref[...])


def output_projection(hiddens, w_out_t, b_out, *, tn=256):
    T1, B, H = hiddens.shape
    V = w_out_t.shape[1]
    M = T1 * B                          # multiple of 8 (sublane-dense)
    h2 = hiddens.reshape(M, H)          # bf16 LHS
    tn = min(tn, V)                     # at real vocab sizes widen to 512
    half = M // 2
    tm = half if (M % 2 == 0 and half % 8 == 0) else M
    out = pl.pallas_call(
        proj_kernel,
        out_shape=jax.ShapeDtypeStruct((M, V), jnp.float32),
        grid_spec=pltpu.PrefetchScalarGridSpec(
            num_scalar_prefetch=0,
            grid=(M // tm, pl.cdiv(V, tn)),
            in_specs=[
                pl.BlockSpec((tm, H), lambda i, j: (i, 0)),
                pl.BlockSpec((H, tn), lambda i, j: (0, j)),
                pl.BlockSpec((1, tn), lambda i, j: (0, j)),
            ],
            out_specs=pl.BlockSpec((tm, tn), lambda i, j: (i, j)),
        ),
        compiler_params=pltpu.CompilerParams(
            dimension_semantics=("parallel", "parallel")),
    )(h2, w_out_t, b_out)
    return out.reshape(T1, B, V)


# ----------------------------------------------------------------------------
# Full enc_dec forward
# ----------------------------------------------------------------------------
def enc_dec_forward(images, captions, params, num_layers):
    # Encoder_: inception(images) -> fc -> relu -> (dropout = id)
    features = encoder_forward(images, params["w_trunk"], params["b_trunk"],
                               params["w_fc"], params["b_fc"])             # [B, E] f32
    # Decoder_: embed(captions) gather + LSTM over [features ; embeddings] in one kernel
    hiddens = lstm_forward(features, captions, params["embed"],
                           params["w_lstm"], params["b_lstm"], num_layers)  # [T+1, B, H] bf16
    # Linear(hidden -> vocab), batched over all timesteps
    return output_projection(hiddens, params["w_out_t"], params["b_out"])   # [T+1, B, V] f32


def init_params(key, *, embed_size, hidden_size, vocab_size, num_layers,
                img_chw, trunk_feat):
    E, H, V, L = embed_size, hidden_size, vocab_size, num_layers
    assert E == H, "merged [W_ih; W_hh] stacking assumes embed_size == hidden_size"
    ks = jax.random.split(key, 11)
    s = 0.1
    p = {}
    p["w_trunk"] = (s * jax.random.normal(ks[0], (img_chw, trunk_feat))).astype(jnp.bfloat16)
    p["b_trunk"] = s * jax.random.normal(ks[1], (1, trunk_feat), jnp.float32)
    p["w_fc"] = (s * jax.random.normal(ks[2], (trunk_feat, E))).astype(jnp.bfloat16)
    p["b_fc"] = s * jax.random.normal(ks[3], (1, E), jnp.float32)
    # Embedding table kept f32 at toy vocab (128 KiB); use bf16 at real vocab sizes.
    p["embed"] = s * jax.random.normal(ks[4], (V, E), jnp.float32)
    # Merged LSTM weights per layer: rows [0:E] = W_ih^T, rows [E:] = W_hh^T
    # (layer-0 input dim = E, layers>0 = H; E == H here).  Gate order i, f, g, o.
    w_ih = s * jax.random.normal(ks[5], (L, E, 4 * H), jnp.float32)
    w_hh = s * jax.random.normal(ks[6], (L, H, 4 * H), jnp.float32)
    p["w_lstm"] = jnp.concatenate([w_ih, w_hh], axis=1).astype(jnp.bfloat16)  # [L, E+H, 4H]
    b_ih = s * jax.random.normal(ks[7], (L, 4 * H), jnp.float32)
    b_hh = s * jax.random.normal(ks[8], (L, 4 * H), jnp.float32)
    p["b_lstm"] = (b_ih + b_hh).reshape(L, 1, 4 * H)
    p["w_out_t"] = (s * jax.random.normal(ks[9], (H, V))).astype(jnp.bfloat16)
    p["b_out"] = s * jax.random.normal(ks[10], (1, V), jnp.float32)
    return p


if __name__ == "__main__":
    # Shapes chosen on hardware tiles: tb = 8 sublanes with B = 16 so every grid has
    # >= 2 parallel tiles (v7x), E/H/V multiples of 128 lanes, CHW multiple of 128.
    B = 16                 # batch
    C, HH, WW = 3, 32, 32  # CHW = 3072
    T = 8                  # caption length
    embed_size = 128
    hidden_size = 128
    vocab_size = 256
    num_layers = 2
    trunk_feat = 256       # stand-in for inception's 2048-d pooled feature

    key = jax.random.PRNGKey(0)
    k_img, k_cap, k_par = jax.random.split(key, 3)

    images = jax.random.normal(k_img, (B, C, HH, WW), jnp.float32)     # NCHW
    captions = jax.random.randint(k_cap, (T, B), 0, vocab_size, jnp.int32)

    params = init_params(k_par, embed_size=embed_size, hidden_size=hidden_size,
                         vocab_size=vocab_size, num_layers=num_layers,
                         img_chw=C * HH * WW, trunk_feat=trunk_feat)

    outputs = enc_dec_forward(images, captions, params, num_layers)
    outputs = jax.block_until_ready(outputs)
    assert outputs.shape == (T + 1, B, vocab_size), outputs.shape
    assert outputs.dtype == jnp.float32
    assert bool(jnp.all(jnp.isfinite(outputs)))
    print("KERNEL_OK")
</pallas_src>

<mosaic_0001>
module attributes {stable_mosaic.version = 11 : i64} {
  func.func @encoder_kernel(%arg0: i32, %arg1: memref<8x3072xbf16, #tpu.memory_space<vmem>>, %arg2: memref<3072x256xbf16, #tpu.memory_space<vmem>>, %arg3: memref<1x256xf32, #tpu.memory_space<vmem>>, %arg4: memref<256x128xbf16, #tpu.memory_space<vmem>>, %arg5: memref<1x128xf32, #tpu.memory_space<vmem>>, %arg6: memref<8x128xf32, #tpu.memory_space<vmem>>) attributes {dimension_semantics = [#tpu.dimension_semantics<parallel>], iteration_bounds = array<i64: 2>, scalar_prefetch = 0 : i64, scratch_operands = 0 : i64, tpu.core_type = #tpu.core_type<tc>, window_params = [{transform_indices = @transform_0, window_bounds = array<i64: 8, 3072>}, {pipeline_mode = #tpu.pipeline_mode<synchronous>, transform_indices = @transform_1, window_bounds = array<i64: 3072, 256>}, {pipeline_mode = #tpu.pipeline_mode<synchronous>, transform_indices = @transform_2, window_bounds = array<i64: 1, 256>}, {pipeline_mode = #tpu.pipeline_mode<synchronous>, transform_indices = @transform_3, window_bounds = array<i64: 256, 128>}, {pipeline_mode = #tpu.pipeline_mode<synchronous>, transform_indices = @transform_4, window_bounds = array<i64: 1, 128>}, {transform_indices = @transform_5, window_bounds = array<i64: 8, 128>}]} {
    %c0 = arith.constant 0 : index
    %c0_0 = arith.constant 0 : index
    %0 = vector.load %arg1[%c0, %c0_0] : memref<8x3072xbf16, #tpu.memory_space<vmem>>, vector<8x3072xbf16>
    %c0_1 = arith.constant 0 : index
    %c0_2 = arith.constant 0 : index
    %1 = vector.load %arg2[%c0_1, %c0_2] : memref<3072x256xbf16, #tpu.memory_space<vmem>>, vector<3072x256xbf16>
    %cst = arith.constant dense<0.000000e+00> : vector<8x256xf32>
    %2 = tpu.matmul %0, %1, %cst {dimension_numbers = #tpu.dot_dimension_numbers<[1], [0], [0], [1], [0, 0, 1, 1], [], []>} : vector<8x3072xbf16>, vector<3072x256xbf16>, vector<8x256xf32> -> vector<8x256xf32>
    %c0_3 = arith.constant 0 : index
    %c0_4 = arith.constant 0 : index
    %3 = vector.load %arg3[%c0_3, %c0_4] : memref<1x256xf32, #tpu.memory_space<vmem>>, vector<1x256xf32>
    %4 = vector.broadcast %3 : vector<1x256xf32> to vector<8x256xf32>
    %5 = arith.addf %2, %4 : vector<8x256xf32>
    %cst_5 = arith.constant 0.000000e+00 : f32
    %6 = vector.broadcast %cst_5 : f32 to vector<8x256xf32>
    %7 = arith.maximumf %5, %6 : vector<8x256xf32>
    %8 = arith.truncf %7 : vector<8x256xf32> to vector<8x256xbf16>
    %c0_6 = arith.constant 0 : index
    %c0_7 = arith.constant 0 : index
    %9 = vector.load %arg4[%c0_6, %c0_7] : memref<256x128xbf16, #tpu.memory_space<vmem>>, vector<256x128xbf16>
    %cst_8 = arith.constant dense<0.000000e+00> : vector<8x128xf32>
    %10 = tpu.matmul %8, %9, %cst_8 {dimension_numbers = #tpu.dot_dimension_numbers<[1], [0], [0], [1], [0, 0, 1, 1], [], []>} : vector<8x256xbf16>, vector<256x128xbf16>, vector<8x128xf32> -> vector<8x128xf32>
    %c0_9 = arith.constant 0 : index
    %c0_10 = arith.constant 0 : index
    %11 = vector.load %arg5[%c0_9, %c0_10] : memref<1x128xf32, #tpu.memory_space<vmem>>, vector<1x128xf32>
    %12 = vector.broadcast %11 : vector<1x128xf32> to vector<8x128xf32>
    %13 = arith.addf %10, %12 : vector<8x128xf32>
    %cst_11 = arith.constant 0.000000e+00 : f32
    %14 = vector.broadcast %cst_11 : f32 to vector<8x128xf32>
    %15 = arith.maximumf %13, %14 : vector<8x128xf32>
    %c0_12 = arith.constant 0 : index
    %c0_13 = arith.constant 0 : index
    %16 = vector.load %arg6[%c0_12, %c0_13] : memref<8x128xf32, #tpu.memory_space<vmem>>, vector<8x128xf32>
    tpu.vector_store %arg6[%c0_12, %c0_13], %15 {strides = array<i32>} : memref<8x128xf32, #tpu.memory_space<vmem>>, vector<8x128xf32>,
    return
  }
  func.func @transform_0(%arg0: i32) -> (i32, i32) {
    %c0_i32 = arith.constant 0 : i32
    %c0_i32_0 = arith.constant 0 : i32
    return %arg0, %c0_i32 : i32, i32
  }
  func.func @transform_1(%arg0: i32) -> (i32, i32) {
    %c0_i32 = arith.constant 0 : i32
    %c0_i32_0 = arith.constant 0 : i32
    %c0_i32_1 = arith.constant 0 : i32
    return %c0_i32, %c0_i32_0 : i32, i32
  }
  func.func @transform_2(%arg0: i32) -> (i32, i32) {
    %c0_i32 = arith.constant 0 : i32
    %c0_i32_0 = arith.constant 0 : i32
    %c0_i32_1 = arith.constant 0 : i32
    return %c0_i32, %c0_i32_0 : i32, i32
  }
  func.func @transform_3(%arg0: i32) -> (i32, i32) {
    %c0_i32 = arith.constant 0 : i32
    %c0_i32_0 = arith.constant 0 : i32
    %c0_i32_1 = arith.constant 0 : i32
    return %c0_i32, %c0_i32_0 : i32, i32
  }
  func.func @transform_4(%arg0: i32) -> (i32, i32) {
    %c0_i32 = arith.constant 0 : i32
    %c0_i32_0 = arith.constant 0 : i32
    %c0_i32_1 = arith.constant 0 : i32
    return %c0_i32, %c0_i32_0 : i32, i32
  }
  func.func @transform_5(%arg0: i32) -> (i32, i32) {
    %c0_i32 = arith.constant 0 : i32
    %c0_i32_0 = arith.constant 0 : i32
    return %arg0, %c0_i32 : i32, i32
  }
}

</mosaic_0001>

<llo_original>
// kernel: tpu_custom_call.1
$region0: #{tpu_custom_call.1}
  #allocation0 [shape = 'u32[]', space=smem, size = 0x4, offset = 0x4, fixed_abs, tag = 'smem constant byte address 0x4 - core index']
  #allocation1 [shape = 'u32[144,128]{1,0:T(1,128)}', space=vmem, size = 0x12000, scoped, tag = 'internal scratch']
  %s0 = inlined_call_operand.hbm [shape: bf16[16,3072], index: 0, kind: input, shape index: {}]
  %s1 = inlined_call_operand.hbm [shape: bf16[3072,256], index: 1, kind: input, shape index: {}]
  %s2 = inlined_call_operand.hbm [shape: f32[1,256], index: 2, kind: input, shape index: {}]
  %s3 = inlined_call_operand.hbm [shape: bf16[256,128], index: 3, kind: input, shape index: {}]
  %s4 = inlined_call_operand.hbm [shape: f32[1,128], index: 4, kind: input, shape index: {}]
  %s5 = inlined_call_operand.hbm [shape: f32[16,128], index: 5, kind: output, shape index: {}]
  %s6 = sld [smem:[#allocation0]]
  $region73: #{tpu_custom_call.1} parent=0
    _
  %s8 = ssub.s32 1, %s6
  %s9 = scalar_select 0, %s8, %s6
  $region1: #{tpu_custom_call.1} parent=0
    #allocation2 [shape = 'u8[98304]{0}', space=vmem, size = 0x18000, scoped, tag = 'input window, operand 0']
    #allocation3 [shape = 's32[2]{0}', space=sflag, size = 0x8, scoped, tag = 'scoped memory for tpu_custom_call.1']
    #allocation4 [shape = 's32[2]{0}', space=sflag, size = 0x8, scoped, tag = 'scoped memory for tpu_custom_call.1']
    #allocation5 [shape = 'u8[1572864]{0}', space=vmem, size = 0x180000, scoped, tag = 'input window, operand 1, single buffered']
    #allocation6 [shape = 's32[1]{0}', space=sflag, size = 0x4, scoped, tag = 'scoped memory for tpu_custom_call.1']
    #allocation7 [shape = 'u8[1024]{0}', space=vmem, size = 0x400, scoped, tag = 'input window, operand 2, single buffered']
    #allocation8 [shape = 'u8[65536]{0}', space=vmem, size = 0x10000, scoped, tag = 'input window, operand 3, single buffered']
    #allocation9 [shape = 's32[1]{0}', space=sflag, size = 0x4, scoped, tag = 'scoped memory for tpu_custom_call.1']
    #allocation10 [shape = 'u8[512]{0}', space=vmem, size = 0x400, scoped, tag = 'input window, operand 4, single buffered']
    #allocation11 [shape = 'u8[8192]{0}', space=vmem, size = 0x2000, scoped, tag = 'output window, operand 0']
    %10 = vsyncpa [#allocation3], 0
    %s11 = scalar_lea.sflag [#allocation3], 1
    %12 = vsyncpa %s11, 0
    %13 = vsyncpa [#allocation6], 0
    %14 = vsyncpa [#allocation9], 0
    %15 = vsyncpa [#allocation4], 0
    %s16 = scalar_lea.sflag [#allocation4], 1
    %17 = vsyncpa %s16, 0
    loop: start=0, step=1, limit=4
    $region2: #{tpu_custom_call.1} parent=1 // loop_pre_header
      _
    $region3: #{tpu_custom_call.1} parent=1 // loop_header
      %s19 = sphi 0, %s23
      %p20 = scmp.ge.s32.totalorder %s19, 4
      %s29 = sphi 0, %s31
      %s32 = sphi 0, %s29
      %s33 = sphi 0, %s32
      %s49 = sphi 0, %s33
      %s53 = sphi 0, %s53
      %s55 = sphi 0, %s53
      %s56 = sphi 0, %s55
      %s70 = sphi 0, %s56
      %s74 = sphi 0, %s74
      %s76 = sphi 0, %s74
      %s77 = sphi 0, %s76
      %s91 = sphi 0, %s77
      %s95 = sphi 0, %s95
      %s97 = sphi 0, %s95
      %s98 = sphi 0, %s97
      %s112 = sphi 0, %s98
      %s116 = sphi 0, %s116
      %s118 = sphi 0, %s116
      %s119 = sphi 0, %s118
      %s133 = sphi 0, %s119
      %s139 = sphi 0, %s141
      %s142 = sphi 0, %s139
      %s143 = sphi 0, %s142
      %s159 = sphi 0, %s143
    $region4: #{tpu_custom_call.1} parent=1 // loop_header_branch
      %22 = sbr.rel (%p20) target = $region8
    $region5: #{tpu_custom_call.1} parent=1 // loop_body
      %s24 = ssub.s32 %s19, 1
      %s25 = ssub.s32 %s19, 2
      %s26 = sadd.s32 %s19, 1
      %s27 = ssub.s32 %s19, %s26
      %p28 = scmp.eq.s32.totalorder %s27, 0
      %s30 = sadd.s32 %s29, 1
      %s31 = scalar_select %p28, %s29, %s30
      %p34 = pneg %p28
      %p35 = scmp.eq.s32.totalorder %s19, 1
      %p36 = por %p34, %p35
      %p37 = scmp.ne.s32.totalorder %s29, %s32
      %p38 = scmp.eq.s32.totalorder %s19, 0
      %p39 = por %p37, %p38
      %p40 = scmp.ne.s32.totalorder %s29, %s32
      %p41 = scmp.eq.s32.totalorder %s24, 1
      %p42 = por %p40, %p41
      %p43 = scmp.ne.s32.totalorder %s32, %s33
      %p44 = scmp.eq.s32.totalorder %s24, 0
      %p45 = por %p43, %p44
      %p46 = scmp.ne.s32.totalorder %s32, %s33
      %p47 = scmp.eq.s32.totalorder %s25, 1
      %p48 = por %p46, %p47
      %p50 = scmp.ne.s32.totalorder %s33, %s49
      %p51 = scmp.eq.s32.totalorder %s25, 0
      %p52 = por %p50, %p51
      %s54 = sadd.s32 %s53, 1
      %p57 = scmp.eq.s32.totalorder %s19, 1
      %p58 = scmp.ne.s32.totalorder %s53, %s55
      %p59 = scmp.eq.s32.totalorder %s19, 0
      %p60 = por %p58, %p59
      %p61 = scmp.ne.s32.totalorder %s53, %s55
      %p62 = scmp.eq.s32.totalorder %s24, 1
      %p63 = por %p61, %p62
      %p64 = scmp.ne.s32.totalorder %s55, %s56
      %p65 = scmp.eq.s32.totalorder %s24, 0
      %p66 = por %p64, %p65
      %p67 = scmp.ne.s32.totalorder %s55, %s56
      %p68 = scmp.eq.s32.totalorder %s25, 1
      %p69 = por %p67, %p68
      %p71 = scmp.ne.s32.totalorder %s56, %s70
      %p72 = scmp.eq.s32.totalorder %s25, 0
      %p73 = por %p71, %p72
      %s75 = sadd.s32 %s74, 1
      %p78 = scmp.eq.s32.totalorder %s19, 1
      %p79 = scmp.ne.s32.totalorder %s74, %s76
      %p80 = scmp.eq.s32.totalorder %s19, 0
      %p81 = por %p79, %p80
      %p82 = scmp.ne.s32.totalorder %s74, %s76
      %p83 = scmp.eq.s32.totalorder %s24, 1
      %p84 = por %p82, %p83
      %p85 = scmp.ne.s32.totalorder %s76, %s77
      %p86 = scmp.eq.s32.totalorder %s24, 0
      %p87 = por %p85, %p86
      %p88 = scmp.ne.s32.totalorder %s76, %s77
      %p89 = scmp.eq.s32.totalorder %s25, 1
      %p90 = por %p88, %p89
      %p92 = scmp.ne.s32.totalorder %s77, %s91
      %p93 = scmp.eq.s32.totalorder %s25, 0
      %p94 = por %p92, %p93
      %s96 = sadd.s32 %s95, 1
      %p99 = scmp.eq.s32.totalorder %s19, 1
      %p100 = scmp.ne.s32.totalorder %s95, %s97
      %p101 = scmp.eq.s32.totalorder %s19, 0
      %p102 = por %p100, %p101
      %p103 = scmp.ne.s32.totalorder %s95, %s97
      %p104 = scmp.eq.s32.totalorder %s24, 1
      %p105 = por %p103, %p104
      %p106 = scmp.ne.s32.totalorder %s97, %s98
      %p107 = scmp.eq.s32.totalorder %s24, 0
      %p108 = por %p106, %p107
      %p109 = scmp.ne.s32.totalorder %s97, %s98
      %p110 = scmp.eq.s32.totalorder %s25, 1
      %p111 = por %p109, %p110
      %p113 = scmp.ne.s32.totalorder %s98, %s112
      %p114 = scmp.eq.s32.totalorder %s25, 0
      %p115 = por %p113, %p114
      %s117 = sadd.s32 %s116, 1
      %p120 = scmp.eq.s32.totalorder %s19, 1
      %p121 = scmp.ne.s32.totalorder %s116, %s118
      %p122 = scmp.eq.s32.totalorder %s19, 0
      %p123 = por %p121, %p122
      %p124 = scmp.ne.s32.totalorder %s116, %s118
      %p125 = scmp.eq.s32.totalorder %s24, 1
      %p126 = por %p124, %p125
      %p127 = scmp.ne.s32.totalorder %s118, %s119
      %p128 = scmp.eq.s32.totalorder %s24, 0
      %p129 = por %p127, %p128
      %p130 = scmp.ne.s32.totalorder %s118, %s119
      %p131 = scmp.eq.s32.totalorder %s25, 1
      %p132 = por %p130, %p131
      %p134 = scmp.ne.s32.totalorder %s119, %s133
      %p135 = scmp.eq.s32.totalorder %s25, 0
      %p136 = por %p134, %p135
      %s137 = ssub.s32 %s19, %s26
      %p138 = scmp.eq.s32.totalorder %s137, 0
      %s140 = sadd.s32 %s139, 1
      %s141 = scalar_select %p138, %s139, %s140
      %p144 = pneg %p138
      %p145 = scmp.eq.s32.totalorder %s19, 1
      %p146 = por %p144, %p145
      %p147 = scmp.ne.s32.totalorder %s139, %s142
      %p148 = scmp.eq.s32.totalorder %s19, 0
      %p149 = por %p147, %p148
      %p150 = scmp.ne.s32.totalorder %s139, %s142
      %p151 = scmp.eq.s32.totalorder %s24, 1
      %p152 = por %p150, %p151
      %p153 = scmp.ne.s32.totalorder %s142, %s143
      %p154 = scmp.eq.s32.totalorder %s24, 0
      %p155 = por %p153, %p154
      %p156 = scmp.ne.s32.totalorder %s142, %s143
      %p157 = scmp.eq.s32.totalorder %s25, 1
      %p158 = por %p156, %p157
      %p160 = scmp.ne.s32.totalorder %s143, %s159
      %p161 = scmp.eq.s32.totalorder %s25, 0
      %p162 = por %p160, %p161
      %p163 = scmp.le.s32.totalorder 1, %s19
      %p164 = scmp.lt.s32.totalorder %s19, 3
      %p165 = pnand %p163, %p164
      %p166 = pneg %p165
      // Predicated region
      $region9: #{tpu_custom_call.1} parent=5 // pred_check
        _
      $region10: #{tpu_custom_call.1} parent=5 // pred_check_branch
        %168 = sbr.rel (%p165) target = $region12
      $region11: #{tpu_custom_call.1} parent=5 // pred_region
        %s169 = ssub.s32 %s19, 1
        // Predicated region
        $region13: #{tpu_custom_call.1} parent=11 // pred_check
          %p170 = pneg %p66
        $region14: #{tpu_custom_call.1} parent=11 // pred_check_branch
          %172 = sbr.rel (%p170) target = $region16
        $region15: #{tpu_custom_call.1} parent=11 // pred_region
          %s174 = ssub.s32 49152, 49152
          %175 = vsyncadd [#allocation6], %s174
          %s176 = sshll.u32 [#allocation5], 4
          %s177 = int_to_ptr.vmem [resolvable:$true] %s176
          %182 = dma.hbm_to_vmem [thread:$0]  %s1, 49152, %s177, [#allocation6], 128, 128, 8
        $region16: #{tpu_custom_call.1} parent=11 // pred_fallthru
          _
        // Predicated region
        $region17: #{tpu_custom_call.1} parent=11 // pred_check
          %p183 = pneg %p87
        $region18: #{tpu_custom_call.1} parent=11 // pred_check_branch
          %185 = sbr.rel (%p183) target = $region20
        $region19: #{tpu_custom_call.1} parent=11 // pred_region
          %s187 = ssub.s32 32, 32
          %188 = vsyncadd [#allocation6], %s187
          %s190 = sshll.u32 [#allocation7], 4
          %s191 = int_to_ptr.vmem [resolvable:$true] %s190
          %193 = dma.hbm_to_vmem [thread:$0]  %s2, 32, %s191, [#allocation6]
        $region20: #{tpu_custom_call.1} parent=11 // pred_fallthru
          _
        // Predicated region
        $region21: #{tpu_custom_call.1} parent=11 // pred_check
          %p194 = pneg %p108
        $region22: #{tpu_custom_call.1} parent=11 // pred_check_branch
          %196 = sbr.rel (%p194) target = $region24
        $region23: #{tpu_custom_call.1} parent=11 // pred_region
          %s198 = ssub.s32 2048, 2048
          %199 = vsyncadd [#allocation9], %s198
          %s200 = sshll.u32 [#allocation8], 4
          %s201 = int_to_ptr.vmem [resolvable:$true] %s200
          %206 = dma.hbm_to_vmem [thread:$0]  %s3, 2048, %s201, [#allocation9], 64, 64, 4
        $region24: #{tpu_custom_call.1} parent=11 // pred_fallthru
          _
        // Predicated region
        $region25: #{tpu_custom_call.1} parent=11 // pred_check
          %p207 = pneg %p129
        $region26: #{tpu_custom_call.1} parent=11 // pred_check_branch
          %209 = sbr.rel (%p207) target = $region28
        $region27: #{tpu_custom_call.1} parent=11 // pred_region
          %s211 = ssub.s32 16, 16
          %212 = vsyncadd [#allocation9], %s211
          %s214 = sshll.u32 [#allocation10], 4
          %s215 = int_to_ptr.vmem [resolvable:$true] %s214
          %217 = dma.hbm_to_vmem [thread:$0]  %s4, 16, %s215, [#allocation9]
        $region28: #{tpu_custom_call.1} parent=11 // pred_fallthru
          _
      $region12: #{tpu_custom_call.1} parent=5 // pred_fallthru
        _
      %p218 = scmp.lt.s32.totalorder %s19, 2
      // Predicated region
      $region29: #{tpu_custom_call.1} parent=5 // pred_check
        %p219 = pneg %p218
      $region30: #{tpu_custom_call.1} parent=5 // pred_check_branch
        %221 = sbr.rel (%p219) target = $region32
      $region31: #{tpu_custom_call.1} parent=5 // pred_region
        // Predicated region
        $region33: #{tpu_custom_call.1} parent=31 // pred_check
          %p222 = pneg %p39
        $region34: #{tpu_custom_call.1} parent=31 // pred_check_branch
          %224 = sbr.rel (%p222) target = $region36
        $region35: #{tpu_custom_call.1} parent=31 // pred_region
          %s225 = sand.u32 %s29, 1
          %s226 = scalar_lea.sflag [#allocation3], %s225
          %s227 = sand.u32 %s29, 1
          %s228 = smul.addr %s227, 96
          %s229 = scalar_lea.vmem [#allocation2], %s228
          %s231 = ssub.s32 1536, 1536
          %232 = vsyncadd %s226, %s231
          %s233 = smul.addr %s19, 24
          %s234 = smul.addr %s233, 64
          %s235 = scalar_lea.hbm %s0, %s234
          %s237 = sshll.u32 %s229, 4
          %s238 = int_to_ptr.vmem [resolvable:$true] %s237
          %240 = dma.hbm_to_vmem [thread:$0]  %s235, 1536, %s238, %s226
        $region36: #{tpu_custom_call.1} parent=31 // pred_fallthru
          _
      $region32: #{tpu_custom_call.1} parent=5 // pred_fallthru
        _
      %p241 = scmp.le.s32.totalorder 1, %s19
      %p242 = scmp.lt.s32.totalorder %s19, 3
      %p243 = pnand %p241, %p242
      %p244 = pneg %p243
      // Predicated region
      $region37: #{tpu_custom_call.1} parent=5 // pred_check
        _
      $region38: #{tpu_custom_call.1} parent=5 // pred_check_branch
        %246 = sbr.rel (%p243) target = $region40
      $region39: #{tpu_custom_call.1} parent=5 // pred_region
        %s247 = ssub.s32 %s19, 1
        %s248 = sand.u32 %s32, 1
        %s249 = scalar_lea.sflag [#allocation3], %s248
        %s250 = sand.u32 %s32, 1
        %s251 = smul.addr %s250, 96
        %s252 = scalar_lea.vmem [#allocation2], %s251
        // Predicated region
        $region41: #{tpu_custom_call.1} parent=39 // pred_check
          %p253 = pneg %p45
        $region42: #{tpu_custom_call.1} parent=39 // pred_check_branch
          %255 = sbr.rel (%p253) target = $region44
        $region43: #{tpu_custom_call.1} parent=39 // pred_region
          %256 = dma.done %s249, 1536
        $region44: #{tpu_custom_call.1} parent=39 // pred_fallthru
          _
        // Predicated region
        $region45: #{tpu_custom_call.1} parent=39 // pred_check
          %p257 = pneg %p66
        $region46: #{tpu_custom_call.1} parent=39 // pred_check_branch
          %259 = sbr.rel (%p257) target = $region48
        $region47: #{tpu_custom_call.1} parent=39 // pred_region
          %260 = dma.done [#allocation6], 49152
        $region48: #{tpu_custom_call.1} parent=39 // pred_fallthru
          _
        // Predicated region
        $region49: #{tpu_custom_call.1} parent=39 // pred_check
          %p261 = pneg %p87
        $region50: #{tpu_custom_call.1} parent=39 // pred_check_branch
          %263 = sbr.rel (%p261) target = $region52
        $region51: #{tpu_custom_call.1} parent=39 // pred_region
          %264 = dma.done [#allocation6], 32
        $region52: #{tpu_custom_call.1} parent=39 // pred_fallthru
          _
        // Predicated region
        $region53: #{tpu_custom_call.1} parent=39 // pred_check
          %p265 = pneg %p108
        $region54: #{tpu_custom_call.1} parent=39 // pred_check_branch
          %267 = sbr.rel (%p265) target = $region56
        $region55: #{tpu_custom_call.1} parent=39 // pred_region
          %268 = dma.done [#allocation9], 2048
        $region56: #{tpu_custom_call.1} parent=39 // pred_fallthru
          _
        // Predicated region
        $region57: #{tpu_custom_call.1} parent=39 // pred_check
          %p269 = pneg %p129
        $region58: #{tpu_custom_call.1} parent=39 // pred_check_branch
          %271 = sbr.rel (%p269) target = $region60
        $region59: #{tpu_custom_call.1} parent=39 // pred_region
          %272 = dma.done [#allocation9], 16
        $region60: #{tpu_custom_call.1} parent=39 // pred_fallthru
          _
        %s273 = sand.u32 %s32, 1
        %s274 = scalar_lea.sflag [#allocation3], %s273
        %s275 = sand.u32 %s32, 1
        %s276 = smul.addr %s275, 96
        %s277 = scalar_lea.vmem [#allocation2], %s276
        %p278 = pneg %p45
        %p279 = pneg %p42
        %p280 = pneg %p66
        %p281 = pneg %p63
        %p282 = pneg %p87
        %p283 = pneg %p84
        %p284 = pneg %p108
        %p285 = pneg %p105
        %p286 = pneg %p129
        %p287 = pneg %p126
        %p288 = pneg %p155
        %p289 = pneg %p152
        %s290 = sand.u32 %s142, 1
        %s291 = scalar_lea.sflag [#allocation4], %s290
        %s292 = sand.u32 %s142, 1
        %s293 = smul.addr %s292, 8
        %s294 = scalar_lea.vmem [#allocation11], %s293
        %v296 = vld [vmem:[%s252] sm:$0xff]
        %v297 = vld [vmem:[%s252 + $0x8] sm:$0xff]
        %v298 = vld [vmem:[%s252 + $0x10] sm:$0xff]
        %v299 = vld [vmem:[%s252 + $0x18] sm:$0xff]
        %v300 = vld [vmem:[%s252 + $0x20] sm:$0xff]
        %v301 = vld [vmem:[%s252 + $0x28] sm:$0xff]
        %v302 = vld [vmem:[%s252 + $0x30] sm:$0xff]
        %v303 = vld [vmem:[%s252 + $0x38] sm:$0xff]
        %v304 = vld [vmem:[%s252 + $0x40] sm:$0xff]
        %v305 = vld [vmem:[%s252 + $0x48] sm:$0xff]
        %v306 = vld [vmem:[%s252 + $0x50] sm:$0xff]
        %v307 = vld [vmem:[%s252 + $0x58] sm:$0xff]
        %v308 = vld [vmem:[#allocation5] sm:$0xff]
        %v309 = vld [vmem:[#allocation5 + $0x8] sm:$0xff]
        %v310 = vld [vmem:[#allocation5 + $0x10] sm:$0xff]
        %v311 = vld [vmem:[#allocation5 + $0x18] sm:$0xff]
        %v312 = vld [vmem:[#allocation5 + $0x20] sm:$0xff]
        %v313 = vld [vmem:[#allocation5 + $0x28] sm:$0xff]
        %v314 = vld [vmem:[#allocation5 + $0x30] sm:$0xff]
        %v315 = vld [vmem:[#allocation5 + $0x38] sm:$0xff]
        %v316 = vld [vmem:[#allocation5 + $0x40] sm:$0xff]
        %v317 = vld [vmem:[#allocation5 + $0x48] sm:$0xff]
        %v318 = vld [vmem:[#allocation5 + $0x50] sm:$0xff]
        %v319 = vld [vmem:[#allocation5 + $0x58] sm:$0xff]
        %v320 = vld [vmem:[#allocation5 + $0x60] sm:$0xff]
        %v321 = vld [vmem:[#allocation5 + $0x68] sm:$0xff]
        %v322 = vld [vmem:[#allocation5 + $0x70] sm:$0xff]
        %v323 = vld [vmem:[#allocation5 + $0x78] sm:$0xff]
        %v324 = vld [vmem:[#allocation5 + $0x80] sm:$0xff]
        %v325 = vld [vmem:[#allocation5 + $0x88] sm:$0xff]
        %v326 = vld [vmem:[#allocation5 + $0x90] sm:$0xff]
        %v327 = vld [vmem:[#allocation5 + $0x98] sm:$0xff]
        %v328 = vld [vmem:[#allocation5 + $0xa0] sm:$0xff]
        %v329 = vld [vmem:[#allocation5 + $0xa8] sm:$0xff]
        %v330 = vld [vmem:[#allocation5 + $0xb0] sm:$0xff]
        %v331 = vld [vmem:[#allocation5 + $0xb8] sm:$0xff]
        %v332 = vld [vmem:[#allocation5 + $0xc0] sm:$0xff]
        %v333 = vld [vmem:[#allocation5 + $0xc8] sm:$0xff]
        %v334 = vld [vmem:[#allocation5 + $0xd0] sm:$0xff]
        %v335 = vld [vmem:[#allocation5 + $0xd8] sm:$0xff]
        %v336 = vld [vmem:[#allocation5 + $0xe0] sm:$0xff]
        %v337 = vld [vmem:[#allocation5 + $0xe8] sm:$0xff]
        %v338 = vld [vmem:[#allocation5 + $0xf0] sm:$0xff]
        %v339 = vld [vmem:[#allocation5 + $0xf8] sm:$0xff]
        %v340 = vld [vmem:[#allocation5 + $0x100] sm:$0xff]
        %v341 = vld [vmem:[#allocation5 + $0x108] sm:$0xff]
        %v342 = vld [vmem:[#allocation5 + $0x110] sm:$0xff]
        %v343 = vld [vmem:[#allocation5 + $0x118] sm:$0xff]
        %v344 = vld [vmem:[#allocation5 + $0x120] sm:$0xff]
        %v345 = vld [vmem:[#allocation5 + $0x128] sm:$0xff]
        %v346 = vld [vmem:[#allocation5 + $0x130] sm:$0xff]
        %v347 = vld [vmem:[#allocation5 + $0x138] sm:$0xff]
        %v348 = vld [vmem:[#allocation5 + $0x140] sm:$0xff]
        %v349 = vld [vmem:[#allocation5 + $0x148] sm:$0xff]
        %v350 = vld [vmem:[#allocation5 + $0x150] sm:$0xff]
        %v351 = vld [vmem:[#allocation5 + $0x158] sm:$0xff]
        %v352 = vld [vmem:[#allocation5 + $0x160] sm:$0xff]
        %v353 = vld [vmem:[#allocation5 + $0x168] sm:$0xff]
        %v354 = vld [vmem:[#allocation5 + $0x170] sm:$0xff]
        %v355 = vld [vmem:[#allocation5 + $0x178] sm:$0xff]
        %v356 = vld [vmem:[#allocation5 + $0x180] sm:$0xff]
        %v357 = vld [vmem:[#allocation5 + $0x188] sm:$0xff]
        %v358 = vld [vmem:[#allocation5 + $0x190] sm:$0xff]
        %v359 = vld [vmem:[#allocation5 + $0x198] sm:$0xff]
        %v360 = vld [vmem:[#allocation5 + $0x1a0] sm:$0xff]
        %v361 = vld [vmem:[#allocation5 + $0x1a8] sm:$0xff]
        %v362 = vld [vmem:[#allocation5 + $0x1b0] sm:$0xff]
        %v363 = vld [vmem:[#allocation5 + $0x1b8] sm:$0xff]
        %v364 = vld [vmem:[#allocation5 + $0x1c0] sm:$0xff]
        %v365 = vld [vmem:[#allocation5 + $0x1c8] sm:$0xff]
        %v366 = vld [vmem:[#allocation5 + $0x1d0] sm:$0xff]
        %v367 = vld [vmem:[#allocation5 + $0x1d8] sm:$0xff]
        %v368 = vld [vmem:[#allocation5 + $0x1e0] sm:$0xff]
        %v369 = vld [vmem:[#allocation5 + $0x1e8] sm:$0xff]
        %v370 = vld [vmem:[#allocation5 + $0x1f0] sm:$0xff]
        %v371 = vld [vmem:[#allocation5 + $0x1f8] sm:$0xff]
        %v372 = vld [vmem:[#allocation5 + $0x200] sm:$0xff]
        %v373 = vld [vmem:[#allocation5 + $0x208] sm:$0xff]
        %v374 = vld [vmem:[#allocation5 + $0x210] sm:$0xff]
        %v375 = vld [vmem:[#allocation5 + $0x218] sm:$0xff]
        %v376 = vld [vmem:[#allocation5 + $0x220] sm:$0xff]
        %v377 = vld [vmem:[#allocation5 + $0x228] sm:$0xff]
        %v378 = vld [vmem:[#allocation5 + $0x230] sm:$0xff]
        %v379 = vld [vmem:[#allocation5 + $0x238] sm:$0xff]
        %v380 = vld [vmem:[#allocation5 + $0x240] sm:$0xff]
        %v381 = vld [vmem:[#allocation5 + $0x248] sm:$0xff]
        %v382 = vld [vmem:[#allocation5 + $0x250] sm:$0xff]
        %v383 = vld [vmem:[#allocation5 + $0x258] sm:$0xff]
        %v384 = vld [vmem:[#allocation5 + $0x260] sm:$0xff]
        %v385 = vld [vmem:[#allocation5 + $0x268] sm:$0xff]
        %v386 = vld [vmem:[#allocation5 + $0x270] sm:$0xff]
        %v387 = vld [vmem:[#allocation5 + $0x278] sm:$0xff]
        %v388 = vld [vmem:[#allocation5 + $0x280] sm:$0xff]
        %v389 = vld [vmem:[#allocation5 + $0x288] sm:$0xff]
        %v390 = vld [vmem:[#allocation5 + $0x290] sm:$0xff]
        %v391 = vld [vmem:[#allocation5 + $0x298] sm:$0xff]
        %v392 = vld [vmem:[#allocation5 + $0x2a0] sm:$0xff]
        %v393 = vld [vmem:[#allocation5 + $0x2a8] sm:$0xff]
        %v394 = vld [vmem:[#allocation5 + $0x2b0] sm:$0xff]
        %v395 = vld [vmem:[#allocation5 + $0x2b8] sm:$0xff]
        %v396 = vld [vmem:[#allocation5 + $0x2c0] sm:$0xff]
        %v397 = vld [vmem:[#allocation5 + $0x2c8] sm:$0xff]
        %v398 = vld [vmem:[#allocation5 + $0x2d0] sm:$0xff]
        %v399 = vld [vmem:[#allocation5 + $0x2d8] sm:$0xff]
        %v400 = vld [vmem:[#allocation5 + $0x2e0] sm:$0xff]
        %v401 = vld [vmem:[#allocation5 + $0x2e8] sm:$0xff]
        %v402 = vld [vmem:[#allocation5 + $0x2f0] sm:$0xff]
        %v403 = vld [vmem:[#allocation5 + $0x2f8] sm:$0xff]
        %v404 = vld [vmem:[#allocation5 + $0x300] sm:$0xff]
        %v405 = vld [vmem:[#allocation5 + $0x308] sm:$0xff]
        %v406 = vld [vmem:[#allocation5 + $0x310] sm:$0xff]
        %v407 = vld [vmem:[#allocation5 + $0x318] sm:$0xff]
        %v408 = vld [vmem:[#allocation5 + $0x320] sm:$0xff]
        %v409 = vld [vmem:[#allocation5 + $0x328] sm:$0xff]
        %v410 = vld [vmem:[#allocation5 + $0x330] sm:$0xff]
        %v411 = vld [vmem:[#allocation5 + $0x338] sm:$0xff]
        %v412 = vld [vmem:[#allocation5 + $0x340] sm:$0xff]
        %v413 = vld [vmem:[#allocation5 + $0x348] sm:$0xff]
        %v414 = vld [vmem:[#allocation5 + $0x350] sm:$0xff]
        %v415 = vld [vmem:[#allocation5 + $0x358] sm:$0xff]
        %v416 = vld [vmem:[#allocation5 + $0x360] sm:$0xff]
        %v417 = vld [vmem:[#allocation5 + $0x368] sm:$0xff]
        %v418 = vld [vmem:[#allocation5 + $0x370] sm:$0xff]
        %v419 = vld [vmem:[#allocation5 + $0x378] sm:$0xff]
        %v420 = vld [vmem:[#allocation5 + $0x380] sm:$0xff]
        %v421 = vld [vmem:[#allocation5 + $0x388] sm:$0xff]
        %v422 = vld [vmem:[#allocation5 + $0x390] sm:$0xff]
        %v423 = vld [vmem:[#allocation5 + $0x398] sm:$0xff]
        %v424 = vld [vmem:[#allocation5 + $0x3a0] sm:$0xff]
        %v425 = vld [vmem:[#allocation5 + $0x3a8] sm:$0xff]
        %v426 = vld [vmem:[#allocation5 + $0x3b0] sm:$0xff]
        %v427 = vld [vmem:[#allocation5 + $0x3b8] sm:$0xff]
        %v428 = vld [vmem:[#allocation5 + $0x3c0] sm:$0xff]
        %v429 = vld [vmem:[#allocation5 + $0x3c8] sm:$0xff]
        %v430 = vld [vmem:[#allocation5 + $0x3d0] sm:$0xff]
        %v431 = vld [vmem:[#allocation5 + $0x3d8] sm:$0xff]
        %v432 = vld [vmem:[#allocation5 + $0x3e0] sm:$0xff]
        %v433 = vld [vmem:[#allocation5 + $0x3e8] sm:$0xff]
        %v434 = vld [vmem:[#allocation5 + $0x3f0] sm:$0xff]
        %v435 = vld [vmem:[#allocation5 + $0x3f8] sm:$0xff]
        %v436 = vld [vmem:[#allocation5 + $0x400] sm:$0xff]
        %v437 = vld [vmem:[#allocation5 + $0x408] sm:$0xff]
        %v438 = vld [vmem:[#allocation5 + $0x410] sm:$0xff]
        %v439 = vld [vmem:[#allocation5 + $0x418] sm:$0xff]
        %v440 = vld [vmem:[#allocation5 + $0x420] sm:$0xff]
        %v441 = vld [vmem:[#allocation5 + $0x428] sm:$0xff]
        %v442 = vld [vmem:[#allocation5 + $0x430] sm:$0xff]
        %v443 = vld [vmem:[#allocation5 + $0x438] sm:$0xff]
        %v444 = vld [vmem:[#allocation5 + $0x440] sm:$0xff]
        %v445 = vld [vmem:[#allocation5 + $0x448] sm:$0xff]
        %v446 = vld [vmem:[#allocation5 + $0x450] sm:$0xff]
        %v447 = vld [vmem:[#allocation5 + $0x458] sm:$0xff]
        %v448 = vld [vmem:[#allocation5 + $0x460] sm:$0xff]
        %v449 = vld [vmem:[#allocation5 + $0x468] sm:$0xff]
        %v450 = vld [vmem:[#allocation5 + $0x470] sm:$0xff]
        %v451 = vld [vmem:[#allocation5 + $0x478] sm:$0xff]
        %v452 = vld [vmem:[#allocation5 + $0x480] sm:$0xff]
        %v453 = vld [vmem:[#allocation5 + $0x488] sm:$0xff]
        %v454 = vld [vmem:[#allocation5 + $0x490] sm:$0xff]
        %v455 = vld [vmem:[#allocation5 + $0x498] sm:$0xff]
        %v456 = vld [vmem:[#allocation5 + $0x4a0] sm:$0xff]
        %v457 = vld [vmem:[#allocation5 + $0x4a8] sm:$0xff]
        %v458 = vld [vmem:[#allocation5 + $0x4b0] sm:$0xff]
        %v459 = vld [vmem:[#allocation5 + $0x4b8] sm:$0xff]
        %v460 = vld [vmem:[#allocation5 + $0x4c0] sm:$0xff]
        %v461 = vld [vmem:[#allocation5 + $0x4c8] sm:$0xff]
        %v462 = vld [vmem:[#allocation5 + $0x4d0] sm:$0xff]
        %v463 = vld [vmem:[#allocation5 + $0x4d8] sm:$0xff]
        %v464 = vld [vmem:[#allocation5 + $0x4e0] sm:$0xff]
        %v465 = vld [vmem:[#allocation5 + $0x4e8] sm:$0xff]
        %v466 = vld [vmem:[#allocation5 + $0x4f0] sm:$0xff]
        %v467 = vld [vmem:[#allocation5 + $0x4f8] sm:$0xff]
        %v468 = vld [vmem:[#allocation5 + $0x500] sm:$0xff]
        %v469 = vld [vmem:[#allocation5 + $0x508] sm:$0xff]
        %v470 = vld [vmem:[#allocation5 + $0x510] sm:$0xff]
        %v471 = vld [vmem:[#allocation5 + $0x518] sm:$0xff]
        %v472 = vld [vmem:[#allocation5 + $0x520] sm:$0xff]
        %v473 = vld [vmem:[#allocation5 + $0x528] sm:$0xff]
        %v474 = vld [vmem:[#allocation5 + $0x530] sm:$0xff]
        %v475 = vld [vmem:[#allocation5 + $0x538] sm:$0xff]
        %v476 = vld [vmem:[#allocation5 + $0x540] sm:$0xff]
        %v477 = vld [vmem:[#allocation5 + $0x548] sm:$0xff]
        %v478 = vld [vmem:[#allocation5 + $0x550] sm:$0xff]
        %v479 = vld [vmem:[#allocation5 + $0x558] sm:$0xff]
        %v480 = vld [vmem:[#allocation5 + $0x560] sm:$0xff]
        %v481 = vld [vmem:[#allocation5 + $0x568] sm:$0xff]
        %v482 = vld [vmem:[#allocation5 + $0x570] sm:$0xff]
        %v483 = vld [vmem:[#allocation5 + $0x578] sm:$0xff]
        %v484 = vld [vmem:[#allocation5 + $0x580] sm:$0xff]
        %v485 = vld [vmem:[#allocation5 + $0x588] sm:$0xff]
        %v486 = vld [vmem:[#allocation5 + $0x590] sm:$0xff]
        %v487 = vld [vmem:[#allocation5 + $0x598] sm:$0xff]
        %v488 = vld [vmem:[#allocation5 + $0x5a0] sm:$0xff]
        %v489 = vld [vmem:[#allocation5 + $0x5a8] sm:$0xff]
        %v490 = vld [vmem:[#allocation5 + $0x5b0] sm:$0xff]
        %v491 = vld [vmem:[#allocation5 + $0x5b8] sm:$0xff]
        %v492 = vld [vmem:[#allocation5 + $0x5c0] sm:$0xff]
        %v493 = vld [vmem:[#allocation5 + $0x5c8] sm:$0xff]
        %v494 = vld [vmem:[#allocation5 + $0x5d0] sm:$0xff]
        %v495 = vld [vmem:[#allocation5 + $0x5d8] sm:$0xff]
        %v496 = vld [vmem:[#allocation5 + $0x5e0] sm:$0xff]
        %v497 = vld [vmem:[#allocation5 + $0x5e8] sm:$0xff]
        %v498 = vld [vmem:[#allocation5 + $0x5f0] sm:$0xff]
        %v499 = vld [vmem:[#allocation5 + $0x5f8] sm:$0xff]
        %v500 = vld [vmem:[#allocation5 + $0x600] sm:$0xff]
        %v501 = vld [vmem:[#allocation5 + $0x608] sm:$0xff]
        %v502 = vld [vmem:[#allocation5 + $0x610] sm:$0xff]
        %v503 = vld [vmem:[#allocation5 + $0x618] sm:$0xff]
        %v504 = vld [vmem:[#allocation5 + $0x620] sm:$0xff]
        %v505 = vld [vmem:[#allocation5 + $0x628] sm:$0xff]
        %v506 = vld [vmem:[#allocation5 + $0x630] sm:$0xff]
        %v507 = vld [vmem:[#allocation5 + $0x638] sm:$0xff]
        %v508 = vld [vmem:[#allocation5 + $0x640] sm:$0xff]
        %v509 = vld [vmem:[#allocation5 + $0x648] sm:$0xff]
        %v510 = vld [vmem:[#allocation5 + $0x650] sm:$0xff]
        %v511 = vld [vmem:[#allocation5 + $0x658] sm:$0xff]
        %v512 = vld [vmem:[#allocation5 + $0x660] sm:$0xff]
        %v513 = vld [vmem:[#allocation5 + $0x668] sm:$0xff]
        %v514 = vld [vmem:[#allocation5 + $0x670] sm:$0xff]
        %v515 = vld [vmem:[#allocation5 + $0x678] sm:$0xff]
        %v516 = vld [vmem:[#allocation5 + $0x680] sm:$0xff]
        %v517 = vld [vmem:[#allocation5 + $0x688] sm:$0xff]
        %v518 = vld [vmem:[#allocation5 + $0x690] sm:$0xff]
        %v519 = vld [vmem:[#allocation5 + $0x698] sm:$0xff]
        %v520 = vld [vmem:[#allocation5 + $0x6a0] sm:$0xff]
        %v521 = vld [vmem:[#allocation5 + $0x6a8] sm:$0xff]
        %v522 = vld [vmem:[#allocation5 + $0x6b0] sm:$0xff]
        %v523 = vld [vmem:[#allocation5 + $0x6b8] sm:$0xff]
        %v524 = vld [vmem:[#allocation5 + $0x6c0] sm:$0xff]
        %v525 = vld [vmem:[#allocation5 + $0x6c8] sm:$0xff]
        %v526 = vld [vmem:[#allocation5 + $0x6d0] sm:$0xff]
        %v527 = vld [vmem:[#allocation5 + $0x6d8] sm:$0xff]
        %v528 = vld [vmem:[#allocation5 + $0x6e0] sm:$0xff]
        %v529 = vld [vmem:[#allocation5 + $0x6e8] sm:$0xff]
        %v530 = vld [vmem:[#allocation5 + $0x6f0] sm:$0xff]
        %v531 = vld [vmem:[#allocation5 + $0x6f8] sm:$0xff]
        %v532 = vld [vmem:[#allocation5 + $0x700] sm:$0xff]
        %v533 = vld [vmem:[#allocation5 + $0x708] sm:$0xff]
        %v534 = vld [vmem:[#allocation5 + $0x710] sm:$0xff]
        %v535 = vld [vmem:[#allocation5 + $0x718] sm:$0xff]
        %v536 = vld [vmem:[#allocation5 + $0x720] sm:$0xff]
        %v537 = vld [vmem:[#allocation5 + $0x728] sm:$0xff]
        %v538 = vld [vmem:[#allocation5 + $0x730] sm:$0xff]
        %v539 = vld [vmem:[#allocation5 + $0x738] sm:$0xff]
        %v540 = vld [vmem:[#allocation5 + $0x740] sm:$0xff]
        %v541 = vld [vmem:[#allocation5 + $0x748] sm:$0xff]
        %v542 = vld [vmem:[#allocation5 + $0x750] sm:$0xff]
        %v543 = vld [vmem:[#allocation5 + $0x758] sm:$0xff]
        %v544 = vld [vmem:[#allocation5 + $0x760] sm:$0xff]
        %v545 = vld [vmem:[#allocation5 + $0x768] sm:$0xff]
        %v546 = vld [vmem:[#allocation5 + $0x770] sm:$0xff]
        %v547 = vld [vmem:[#allocation5 + $0x778] sm:$0xff]
        %v548 = vld [vmem:[#allocation5 + $0x780] sm:$0xff]
        %v549 = vld [vmem:[#allocation5 + $0x788] sm:$0xff]
        %v550 = vld [vmem:[#allocation5 + $0x790] sm:$0xff]
        %v551 = vld [vmem:[#allocation5 + $0x798] sm:$0xff]
        %v552 = vld [vmem:[#allocation5 + $0x7a0] sm:$0xff]
        %v553 = vld [vmem:[#allocation5 + $0x7a8] sm:$0xff]
        %v554 = vld [vmem:[#allocation5 + $0x7b0] sm:$0xff]
        %v555 = vld [vmem:[#allocation5 + $0x7b8] sm:$0xff]
        %v556 = vld [vmem:[#allocation5 + $0x7c0] sm:$0xff]
        %v557 = vld [vmem:[#allocation5 + $0x7c8] sm:$0xff]
        %v558 = vld [vmem:[#allocation5 + $0x7d0] sm:$0xff]
        %v559 = vld [vmem:[#allocation5 + $0x7d8] sm:$0xff]
        %v560 = vld [vmem:[#allocation5 + $0x7e0] sm:$0xff]
        %v561 = vld [vmem:[#allocation5 + $0x7e8] sm:$0xff]
        %v562 = vld [vmem:[#allocation5 + $0x7f0] sm:$0xff]
        %v563 = vld [vmem:[#allocation5 + $0x7f8] sm:$0xff]
        %v564 = vld [vmem:[#allocation5 + $0x800] sm:$0xff]
        %v565 = vld [vmem:[#allocation5 + $0x808] sm:$0xff]
        %v566 = vld [vmem:[#allocation5 + $0x810] sm:$0xff]
        %v567 = vld [vmem:[#allocation5 + $0x818] sm:$0xff]
        %v568 = vld [vmem:[#allocation5 + $0x820] sm:$0xff]
        %v569 = vld [vmem:[#allocation5 + $0x828] sm:$0xff]
        %v570 = vld [vmem:[#allocation5 + $0x830] sm:$0xff]
        %v571 = vld [vmem:[#allocation5 + $0x838] sm:$0xff]
        %v572 = vld [vmem:[#allocation5 + $0x840] sm:$0xff]
        %v573 = vld [vmem:[#allocation5 + $0x848] sm:$0xff]
        %v574 = vld [vmem:[#allocation5 + $0x850] sm:$0xff]
        %v575 = vld [vmem:[#allocation5 + $0x858] sm:$0xff]
        %v576 = vld [vmem:[#allocation5 + $0x860] sm:$0xff]
        %v577 = vld [vmem:[#allocation5 + $0x868] sm:$0xff]
        %v578 = vld [vmem:[#allocation5 + $0x870] sm:$0xff]
        %v579 = vld [vmem:[#allocation5 + $0x878] sm:$0xff]
        %v580 = vld [vmem:[#allocation5 + $0x880] sm:$0xff]
        %v581 = vld [vmem:[#allocation5 + $0x888] sm:$0xff]
        %v582 = vld [vmem:[#allocation5 + $0x890] sm:$0xff]
        %v583 = vld [vmem:[#allocation5 + $0x898] sm:$0xff]
        %v584 = vld [vmem:[#allocation5 + $0x8a0] sm:$0xff]
        %v585 = vld [vmem:[#allocation5 + $0x8a8] sm:$0xff]
        %v586 = vld [vmem:[#allocation5 + $0x8b0] sm:$0xff]
        %v587 = vld [vmem:[#allocation5 + $0x8b8] sm:$0xff]
        %v588 = vld [vmem:[#allocation5 + $0x8c0] sm:$0xff]
        %v589 = vld [vmem:[#allocation5 + $0x8c8] sm:$0xff]
        %v590 = vld [vmem:[#allocation5 + $0x8d0] sm:$0xff]
        %v591 = vld [vmem:[#allocation5 + $0x8d8] sm:$0xff]
        %v592 = vld [vmem:[#allocation5 + $0x8e0] sm:$0xff]
        %v593 = vld [vmem:[#allocation5 + $0x8e8] sm:$0xff]
        %v594 = vld [vmem:[#allocation5 + $0x8f0] sm:$0xff]
        %v595 = vld [vmem:[#allocation5 + $0x8f8] sm:$0xff]
        %v596 = vld [vmem:[#allocation5 + $0x900] sm:$0xff]
        %v597 = vld [vmem:[#allocation5 + $0x908] sm:$0xff]
        %v598 = vld [vmem:[#allocation5 + $0x910] sm:$0xff]
        %v599 = vld [vmem:[#allocation5 + $0x918] sm:$0xff]
        %v600 = vld [vmem:[#allocation5 + $0x920] sm:$0xff]
        %v601 = vld [vmem:[#allocation5 + $0x928] sm:$0xff]
        %v602 = vld [vmem:[#allocation5 + $0x930] sm:$0xff]
        %v603 = vld [vmem:[#allocation5 + $0x938] sm:$0xff]
        %v604 = vld [vmem:[#allocation5 + $0x940] sm:$0xff]
        %v605 = vld [vmem:[#allocation5 + $0x948] sm:$0xff]
        %v606 = vld [vmem:[#allocation5 + $0x950] sm:$0xff]
        %v607 = vld [vmem:[#allocation5 + $0x958] sm:$0xff]
        %v608 = vld [vmem:[#allocation5 + $0x960] sm:$0xff]
        %v609 = vld [vmem:[#allocation5 + $0x968] sm:$0xff]
        %v610 = vld [vmem:[#allocation5 + $0x970] sm:$0xff]
        %v611 = vld [vmem:[#allocation5 + $0x978] sm:$0xff]
        %v612 = vld [vmem:[#allocation5 + $0x980] sm:$0xff]
        %v613 = vld [vmem:[#allocation5 + $0x988] sm:$0xff]
        %v614 = vld [vmem:[#allocation5 + $0x990] sm:$0xff]
        %v615 = vld [vmem:[#allocation5 + $0x998] sm:$0xff]
        %v616 = vld [vmem:[#allocation5 + $0x9a0] sm:$0xff]
        %v617 = vld [vmem:[#allocation5 + $0x9a8] sm:$0xff]
        %v618 = vld [vmem:[#allocation5 + $0x9b0] sm:$0xff]
        %v619 = vld [vmem:[#allocation5 + $0x9b8] sm:$0xff]
        %v620 = vld [vmem:[#allocation5 + $0x9c0] sm:$0xff]
        %v621 = vld [vmem:[#allocation5 + $0x9c8] sm:$0xff]
        %v622 = vld [vmem:[#allocation5 + $0x9d0] sm:$0xff]
        %v623 = vld [vmem:[#allocation5 + $0x9d8] sm:$0xff]
        %v624 = vld [vmem:[#allocation5 + $0x9e0] sm:$0xff]
        %v625 = vld [vmem:[#allocation5 + $0x9e8] sm:$0xff]
        %v626 = vld [vmem:[#allocation5 + $0x9f0] sm:$0xff]
        %v627 = vld [vmem:[#allocation5 + $0x9f8] sm:$0xff]
        %v628 = vld [vmem:[#allocation5 + $0xa00] sm:$0xff]
        %v629 = vld [vmem:[#allocation5 + $0xa08] sm:$0xff]
        %v630 = vld [vmem:[#allocation5 + $0xa10] sm:$0xff]
        %v631 = vld [vmem:[#allocation5 + $0xa18] sm:$0xff]
        %v632 = vld [vmem:[#allocation5 + $0xa20] sm:$0xff]
        %v633 = vld [vmem:[#allocation5 + $0xa28] sm:$0xff]
        %v634 = vld [vmem:[#allocation5 + $0xa30] sm:$0xff]
        %v635 = vld [vmem:[#allocation5 + $0xa38] sm:$0xff]
        %v636 = vld [vmem:[#allocation5 + $0xa40] sm:$0xff]
        %v637 = vld [vmem:[#allocation5 + $0xa48] sm:$0xff]
        %v638 = vld [vmem:[#allocation5 + $0xa50] sm:$0xff]
        %v639 = vld [vmem:[#allocation5 + $0xa58] sm:$0xff]
        %v640 = vld [vmem:[#allocation5 + $0xa60] sm:$0xff]
        %v641 = vld [vmem:[#allocation5 + $0xa68] sm:$0xff]
        %v642 = vld [vmem:[#allocation5 + $0xa70] sm:$0xff]
        %v643 = vld [vmem:[#allocation5 + $0xa78] sm:$0xff]
        %v644 = vld [vmem:[#allocation5 + $0xa80] sm:$0xff]
        %v645 = vld [vmem:[#allocation5 + $0xa88] sm:$0xff]
        %v646 = vld [vmem:[#allocation5 + $0xa90] sm:$0xff]
        %v647 = vld [vmem:[#allocation5 + $0xa98] sm:$0xff]
        %v648 = vld [vmem:[#allocation5 + $0xaa0] sm:$0xff]
        %v649 = vld [vmem:[#allocation5 + $0xaa8] sm:$0xff]
        %v650 = vld [vmem:[#allocation5 + $0xab0] sm:$0xff]
        %v651 = vld [vmem:[#allocation5 + $0xab8] sm:$0xff]
        %v652 = vld [vmem:[#allocation5 + $0xac0] sm:$0xff]
        %v653 = vld [vmem:[#allocation5 + $0xac8] sm:$0xff]
        %v654 = vld [vmem:[#allocation5 + $0xad0] sm:$0xff]
        %v655 = vld [vmem:[#allocation5 + $0xad8] sm:$0xff]
        %v656 = vld [vmem:[#allocation5 + $0xae0] sm:$0xff]
        %v657 = vld [vmem:[#allocation5 + $0xae8] sm:$0xff]
        %v658 = vld [vmem:[#allocation5 + $0xaf0] sm:$0xff]
        %v659 = vld [vmem:[#allocation5 + $0xaf8] sm:$0xff]
        %v660 = vld [vmem:[#allocation5 + $0xb00] sm:$0xff]
        %v661 = vld [vmem:[#allocation5 + $0xb08] sm:$0xff]
        %v662 = vld [vmem:[#allocation5 + $0xb10] sm:$0xff]
        %v663 = vld [vmem:[#allocation5 + $0xb18] sm:$0xff]
        %v664 = vld [vmem:[#allocation5 + $0xb20] sm:$0xff]
        %v665 = vld [vmem:[#allocation5 + $0xb28] sm:$0xff]
        %v666 = vld [vmem:[#allocation5 + $0xb30] sm:$0xff]
        %v667 = vld [vmem:[#allocation5 + $0xb38] sm:$0xff]
        %v668 = vld [vmem:[#allocation5 + $0xb40] sm:$0xff]
        %v669 = vld [vmem:[#allocation5 + $0xb48] sm:$0xff]
        %v670 = vld [vmem:[#allocation5 + $0xb50] sm:$0xff]
        %v671 = vld [vmem:[#allocation5 + $0xb58] sm:$0xff]
        %v672 = vld [vmem:[#allocation5 + $0xb60] sm:$0xff]
        %v673 = vld [vmem:[#allocation5 + $0xb68] sm:$0xff]
        %v674 = vld [vmem:[#allocation5 + $0xb70] sm:$0xff]
        %v675 = vld [vmem:[#allocation5 + $0xb78] sm:$0xff]
        %v676 = vld [vmem:[#allocation5 + $0xb80] sm:$0xff]
        %v677 = vld [vmem:[#allocation5 + $0xb88] sm:$0xff]
        %v678 = vld [vmem:[#allocation5 + $0xb90] sm:$0xff]
        %v679 = vld [vmem:[#allocation5 + $0xb98] sm:$0xff]
        %v680 = vld [vmem:[#allocation5 + $0xba0] sm:$0xff]
        %v681 = vld [vmem:[#allocation5 + $0xba8] sm:$0xff]
        %v682 = vld [vmem:[#allocation5 + $0xbb0] sm:$0xff]
        %v683 = vld [vmem:[#allocation5 + $0xbb8] sm:$0xff]
        %v684 = vld [vmem:[#allocation5 + $0xbc0] sm:$0xff]
        %v685 = vld [vmem:[#allocation5 + $0xbc8] sm:$0xff]
        %v686 = vld [vmem:[#allocation5 + $0xbd0] sm:$0xff]
        %v687 = vld [vmem:[#allocation5 + $0xbd8] sm:$0xff]
        %v688 = vld [vmem:[#allocation5 + $0xbe0] sm:$0xff]
        %v689 = vld [vmem:[#allocation5 + $0xbe8] sm:$0xff]
        %v690 = vld [vmem:[#allocation5 + $0xbf0] sm:$0xff]
        %v691 = vld [vmem:[#allocation5 + $0xbf8] sm:$0xff]
        %v692 = vld [vmem:[#allocation7] sm:$0x3]
        %v694 = vlaneseq
        %v695 = vshrl.u32 %v694, 7
        %v696 = vsub.s32 0, %v695
        %v697 = vrot.slane %v692, %v696
        %v698 = vlaneseq
        %v699 = vshrl.u32 %v698, 7
        %v700 = vsub.s32 1, %v699
        %v701 = vrot.slane %v692, %v700
        %v716 = vunpack.c.l.b16 %v296
        %v717 = vunpack.c.h.b16 %v296
        %v718 = vunpack.c.l.b16 %v297
        %v719 = vunpack.c.h.b16 %v297
        %v720 = vunpack.c.l.b16 %v298
        %v721 = vunpack.c.h.b16 %v298
        %v722 = vunpack.c.l.b16 %v299
        %v723 = vunpack.c.h.b16 %v299
        %v724 = vunpack.c.l.b16 %v300
        %v725 = vunpack.c.h.b16 %v300
        %v726 = vunpack.c.l.b16 %v301
        %v727 = vunpack.c.h.b16 %v301
        %v728 = vunpack.c.l.b16 %v302
        %v729 = vunpack.c.h.b16 %v302
        %v730 = vunpack.c.l.b16 %v303
        %v731 = vunpack.c.h.b16 %v303
        %v732 = vunpack.c.l.b16 %v304
        %v733 = vunpack.c.h.b16 %v304
        %v734 = vunpack.c.l.b16 %v305
        %v735 = vunpack.c.h.b16 %v305
        %v736 = vunpack.c.l.b16 %v306
        %v737 = vunpack.c.h.b16 %v306
        %v738 = vunpack.c.l.b16 %v307
        %v739 = vunpack.c.h.b16 %v307
        %v740 = vpack.c.b16 %v716, %v716
        %v741 = vpack.c.b16 %v717, %v717
        %v742 = vpack.c.b16 %v718, %v718
        %v743 = vpack.c.b16 %v719, %v719
        %v744 = vpack.c.b16 %v720, %v720
        %v745 = vpack.c.b16 %v721, %v721
        %v746 = vpack.c.b16 %v722, %v722
        %v747 = vpack.c.b16 %v723, %v723
        %v748 = vpack.c.b16 %v724, %v724
        %v749 = vpack.c.b16 %v725, %v725
        %v750 = vpack.c.b16 %v726, %v726
        %v751 = vpack.c.b16 %v727, %v727
        %v752 = vpack.c.b16 %v728, %v728
        %v753 = vpack.c.b16 %v729, %v729
        %v754 = vpack.c.b16 %v730, %v730
        %v755 = vpack.c.b16 %v731, %v731
        %v756 = vpack.c.b16 %v732, %v732
        %v757 = vpack.c.b16 %v733, %v733
        %v758 = vpack.c.b16 %v734, %v734
        %v759 = vpack.c.b16 %v735, %v735
        %v760 = vpack.c.b16 %v736, %v736
        %v761 = vpack.c.b16 %v737, %v737
        %v762 = vpack.c.b16 %v738, %v738
        %v763 = vpack.c.b16 %v739, %v739
        %v1172 = vunpack.c.l.b16 %v308
        %v1173 = vunpack.c.h.b16 %v308
        %v1174 = vunpack.c.l.b16 %v309
        %v1175 = vunpack.c.h.b16 %v309
        %v1176 = vunpack.c.l.b16 %v310
        %v1177 = vunpack.c.h.b16 %v310
        %v1178 = vunpack.c.l.b16 %v311
        %v1179 = vunpack.c.h.b16 %v311
        %v1180 = vunpack.c.l.b16 %v312
        %v1181 = vunpack.c.h.b16 %v312
        %v1182 = vunpack.c.l.b16 %v313
        %v1183 = vunpack.c.h.b16 %v313
        %v1184 = vunpack.c.l.b16 %v314
        %v1185 = vunpack.c.h.b16 %v314
        %v1186 = vunpack.c.l.b16 %v315
        %v1187 = vunpack.c.h.b16 %v315
        %v1188 = vunpack.c.l.b16 %v316
        %v1189 = vunpack.c.h.b16 %v316
        %v1190 = vunpack.c.l.b16 %v317
        %v1191 = vunpack.c.h.b16 %v317
        %v1192 = vunpack.c.l.b16 %v318
        %v1193 = vunpack.c.h.b16 %v318
        %v1194 = vunpack.c.l.b16 %v319
        %v1195 = vunpack.c.h.b16 %v319
        %v1196 = vunpack.c.l.b16 %v320
        %v1197 = vunpack.c.h.b16 %v320
        %v1198 = vunpack.c.l.b16 %v321
        %v1199 = vunpack.c.h.b16 %v321
        %v1200 = vunpack.c.l.b16 %v322
        %v1201 = vunpack.c.h.b16 %v322
        %v1202 = vunpack.c.l.b16 %v323
        %v1203 = vunpack.c.h.b16 %v323
        %v1204 = vunpack.c.l.b16 %v324
        %v1205 = vunpack.c.h.b16 %v324
        %v1206 = vunpack.c.l.b16 %v325
        %v1207 = vunpack.c.h.b16 %v325
        %v1208 = vunpack.c.l.b16 %v326
        %v1209 = vunpack.c.h.b16 %v326
        %v1210 = vunpack.c.l.b16 %v327
        %v1211 = vunpack.c.h.b16 %v327
        %v1212 = vunpack.c.l.b16 %v328
        %v1213 = vunpack.c.h.b16 %v328
        %v1214 = vunpack.c.l.b16 %v329
        %v1215 = vunpack.c.h.b16 %v329
        %v1216 = vunpack.c.l.b16 %v330
        %v1217 = vunpack.c.h.b16 %v330
        %v1218 = vunpack.c.l.b16 %v331
        %v1219 = vunpack.c.h.b16 %v331
        %v1220 = vunpack.c.l.b16 %v332
        %v1221 = vunpack.c.h.b16 %v332
        %v1222 = vunpack.c.l.b16 %v333
        %v1223 = vunpack.c.h.b16 %v333
        %v1224 = vunpack.c.l.b16 %v334
        %v1225 = vunpack.c.h.b16 %v334
        %v1226 = vunpack.c.l.b16 %v335
        %v1227 = vunpack.c.h.b16 %v335
        %v1228 = vunpack.c.l.b16 %v336
        %v1229 = vunpack.c.h.b16 %v336
        %v1230 = vunpack.c.l.b16 %v337
        %v1231 = vunpack.c.h.b16 %v337
        %v1232 = vunpack.c.l.b16 %v338
        %v1233 = vunpack.c.h.b16 %v338
        %v1234 = vunpack.c.l.b16 %v339
        %v1235 = vunpack.c.h.b16 %v339
        %v1236 = vunpack.c.l.b16 %v340
        %v1237 = vunpack.c.h.b16 %v340
        %v1238 = vunpack.c.l.b16 %v341
        %v1239 = vunpack.c.h.b16 %v341
        %v1240 = vunpack.c.l.b16 %v342
        %v1241 = vunpack.c.h.b16 %v342
        %v1242 = vunpack.c.l.b16 %v343
        %v1243 = vunpack.c.h.b16 %v343
        %v1244 = vunpack.c.l.b16 %v344
        %v1245 = vunpack.c.h.b16 %v344
        %v1246 = vunpack.c.l.b16 %v345
        %v1247 = vunpack.c.h.b16 %v345
        %v1248 = vunpack.c.l.b16 %v346
        %v1249 = vunpack.c.h.b16 %v346
        %v1250 = vunpack.c.l.b16 %v347
        %v1251 = vunpack.c.h.b16 %v347
        %v1252 = vunpack.c.l.b16 %v348
        %v1253 = vunpack.c.h.b16 %v348
        %v1254 = vunpack.c.l.b16 %v349
        %v1255 = vunpack.c.h.b16 %v349
        %v1256 = vunpack.c.l.b16 %v350
        %v1257 = vunpack.c.h.b16 %v350
        %v1258 = vunpack.c.l.b16 %v351
        %v1259 = vunpack.c.h.b16 %v351
        %v1260 = vunpack.c.l.b16 %v352
        %v1261 = vunpack.c.h.b16 %v352
        %v1262 = vunpack.c.l.b16 %v353
        %v1263 = vunpack.c.h.b16 %v353
        %v1264 = vunpack.c.l.b16 %v354
        %v1265 = vunpack.c.h.b16 %v354
        %v1266 = vunpack.c.l.b16 %v355
        %v1267 = vunpack.c.h.b16 %v355
        %v1268 = vunpack.c.l.b16 %v356
        %v1269 = vunpack.c.h.b16 %v356
        %v1270 = vunpack.c.l.b16 %v357
        %v1271 = vunpack.c.h.b16 %v357
        %v1272 = vunpack.c.l.b16 %v358
        %v1273 = vunpack.c.h.b16 %v358
        %v1274 = vunpack.c.l.b16 %v359
        %v1275 = vunpack.c.h.b16 %v359
        %v1276 = vunpack.c.l.b16 %v360
        %v1277 = vunpack.c.h.b16 %v360
        %v1278 = vunpack.c.l.b16 %v361
        %v1279 = vunpack.c.h.b16 %v361
        %v1280 = vunpack.c.l.b16 %v362
        %v1281 = vunpack.c.h.b16 %v362
        %v1282 = vunpack.c.l.b16 %v363
        %v1283 = vunpack.c.h.b16 %v363
        %v1284 = vunpack.c.l.b16 %v364
        %v1285 = vunpack.c.h.b16 %v364
        %v1286 = vunpack.c.l.b16 %v365
        %v1287 = vunpack.c.h.b16 %v365
        %v1288 = vunpack.c.l.b16 %v366
        %v1289 = vunpack.c.h.b16 %v366
        %v1290 = vunpack.c.l.b16 %v367
        %v1291 = vunpack.c.h.b16 %v367
        %v1292 = vunpack.c.l.b16 %v368
        %v1293 = vunpack.c.h.b16 %v368
        %v1294 = vunpack.c.l.b16 %v369
        %v1295 = vunpack.c.h.b16 %v369
        %v1296 = vunpack.c.l.b16 %v370
        %v1297 = vunpack.c.h.b16 %v370
        %v1298 = vunpack.c.l.b16 %v371
        %v1299 = vunpack.c.h.b16 %v371
        %v1300 = vunpack.c.l.b16 %v372
        %v1301 = vunpack.c.h.b16 %v372
        %v1302 = vunpack.c.l.b16 %v373
        %v1303 = vunpack.c.h.b16 %v373
        %v1304 = vunpack.c.l.b16 %v374
        %v1305 = vunpack.c.h.b16 %v374
        %v1306 = vunpack.c.l.b16 %v375
        %v1307 = vunpack.c.h.b16 %v375
        %v1308 = vunpack.c.l.b16 %v376
        %v1309 = vunpack.c.h.b16 %v376
        %v1310 = vunpack.c.l.b16 %v377
        %v1311 = vunpack.c.h.b16 %v377
        %v1312 = vunpack.c.l.b16 %v378
        %v1313 = vunpack.c.h.b16 %v378
        %v1314 = vunpack.c.l.b16 %v379
        %v1315 = vunpack.c.h.b16 %v379
        %v1316 = vunpack.c.l.b16 %v380
        %v1317 = vunpack.c.h.b16 %v380
        %v1318 = vunpack.c.l.b16 %v381
        %v1319 = vunpack.c.h.b16 %v381
        %v1320 = vunpack.c.l.b16 %v382
        %v1321 = vunpack.c.h.b16 %v382
        %v1322 = vunpack.c.l.b16 %v383
        %v1323 = vunpack.c.h.b16 %v383
        %v1324 = vunpack.c.l.b16 %v384
        %v1325 = vunpack.c.h.b16 %v384
        %v1326 = vunpack.c.l.b16 %v385
        %v1327 = vunpack.c.h.b16 %v385
        %v1328 = vunpack.c.l.b16 %v386
        %v1329 = vunpack.c.h.b16 %v386
        %v1330 = vunpack.c.l.b16 %v387
        %v1331 = vunpack.c.h.b16 %v387
        %v1332 = vunpack.c.l.b16 %v388
        %v1333 = vunpack.c.h.b16 %v388
        %v1334 = vunpack.c.l.b16 %v389
        %v1335 = vunpack.c.h.b16 %v389
        %v1336 = vunpack.c.l.b16 %v390
        %v1337 = vunpack.c.h.b16 %v390
        %v1338 = vunpack.c.l.b16 %v391
        %v1339 = vunpack.c.h.b16 %v391
        %v1340 = vunpack.c.l.b16 %v392
        %v1341 = vunpack.c.h.b16 %v392
        %v1342 = vunpack.c.l.b16 %v393
        %v1343 = vunpack.c.h.b16 %v393
        %v1344 = vunpack.c.l.b16 %v394
        %v1345 = vunpack.c.h.b16 %v394
        %v1346 = vunpack.c.l.b16 %v395
        %v1347 = vunpack.c.h.b16 %v395
        %v1348 = vunpack.c.l.b16 %v396
        %v1349 = vunpack.c.h.b16 %v396
        %v1350 = vunpack.c.l.b16 %v397
        %v1351 = vunpack.c.h.b16 %v397
        %v1352 = vunpack.c.l.b16 %v398
        %v1353 = vunpack.c.h.b16 %v398
        %v1354 = vunpack.c.l.b16 %v399
        %v1355 = vunpack.c.h.b16 %v399
        %v1356 = vunpack.c.l.b16 %v400
        %v1357 = vunpack.c.h.b16 %v400
        %v1358 = vunpack.c.l.b16 %v401
        %v1359 = vunpack.c.h.b16 %v401
        %v1360 = vunpack.c.l.b16 %v402
        %v1361 = vunpack.c.h.b16 %v402
        %v1362 = vunpack.c.l.b16 %v403
        %v1363 = vunpack.c.h.b16 %v403
        %v1364 = vunpack.c.l.b16 %v404
        %v1365 = vunpack.c.h.b16 %v404
        %v1366 = vunpack.c.l.b16 %v405
        %v1367 = vunpack.c.h.b16 %v405
        %v1368 = vunpack.c.l.b16 %v406
        %v1369 = vunpack.c.h.b16 %v406
        %v1370 = vunpack.c.l.b16 %v407
        %v1371 = vunpack.c.h.b16 %v407
        %v1372 = vunpack.c.l.b16 %v408
        %v1373 = vunpack.c.h.b16 %v408
        %v1374 = vunpack.c.l.b16 %v409
        %v1375 = vunpack.c.h.b16 %v409
        %v1376 = vunpack.c.l.b16 %v410
        %v1377 = vunpack.c.h.b16 %v410
        %v1378 = vunpack.c.l.b16 %v411
        %v1379 = vunpack.c.h.b16 %v411
        %v1380 = vunpack.c.l.b16 %v412
        %v1381 = vunpack.c.h.b16 %v412
        %v1382 = vunpack.c.l.b16 %v413
        %v1383 = vunpack.c.h.b16 %v413
        %v1384 = vunpack.c.l.b16 %v414
        %v1385 = vunpack.c.h.b16 %v414
        %v1386 = vunpack.c.l.b16 %v415
        %v1387 = vunpack.c.h.b16 %v415
        %v1388 = vunpack.c.l.b16 %v416
        %v1389 = vunpack.c.h.b16 %v416
        %v1390 = vunpack.c.l.b16 %v417
        %v1391 = vunpack.c.h.b16 %v417
        %v1392 = vunpack.c.l.b16 %v418
        %v1393 = vunpack.c.h.b16 %v418
        %v1394 = vunpack.c.l.b16 %v419
        %v1395 = vunpack.c.h.b16 %v419
        %v1396 = vunpack.c.l.b16 %v420
        %v1397 = vunpack.c.h.b16 %v420
        %v1398 = vunpack.c.l.b16 %v421
        %v1399 = vunpack.c.h.b16 %v421
        %v1400 = vunpack.c.l.b16 %v422
        %v1401 = vunpack.c.h.b16 %v422
        %v1402 = vunpack.c.l.b16 %v423
        %v1403 = vunpack.c.h.b16 %v423
        %v1404 = vunpack.c.l.b16 %v424
        %v1405 = vunpack.c.h.b16 %v424
        %v1406 = vunpack.c.l.b16 %v425
        %v1407 = vunpack.c.h.b16 %v425
        %v1408 = vunpack.c.l.b16 %v426
        %v1409 = vunpack.c.h.b16 %v426
        %v1410 = vunpack.c.l.b16 %v427
        %v1411 = vunpack.c.h.b16 %v427
        %v1412 = vunpack.c.l.b16 %v428
        %v1413 = vunpack.c.h.b16 %v428
        %v1414 = vunpack.c.l.b16 %v429
        %v1415 = vunpack.c.h.b16 %v429
        %v1416 = vunpack.c.l.b16 %v430
        %v1417 = vunpack.c.h.b16 %v430
        %v1418 = vunpack.c.l.b16 %v431
        %v1419 = vunpack.c.h.b16 %v431
        %v1420 = vunpack.c.l.b16 %v432
        %v1421 = vunpack.c.h.b16 %v432
        %v1422 = vunpack.c.l.b16 %v433
        %v1423 = vunpack.c.h.b16 %v433
        %v1424 = vunpack.c.l.b16 %v434
        %v1425 = vunpack.c.h.b16 %v434
        %v1426 = vunpack.c.l.b16 %v435
        %v1427 = vunpack.c.h.b16 %v435
        %v1428 = vunpack.c.l.b16 %v436
        %v1429 = vunpack.c.h.b16 %v436
        %v1430 = vunpack.c.l.b16 %v437
        %v1431 = vunpack.c.h.b16 %v437
        %v1432 = vunpack.c.l.b16 %v438
        %v1433 = vunpack.c.h.b16 %v438
        %v1434 = vunpack.c.l.b16 %v439
        %v1435 = vunpack.c.h.b16 %v439
        %v1436 = vunpack.c.l.b16 %v440
        %v1437 = vunpack.c.h.b16 %v440
        %v1438 = vunpack.c.l.b16 %v441
        %v1439 = vunpack.c.h.b16 %v441
        %v1440 = vunpack.c.l.b16 %v442
        %v1441 = vunpack.c.h.b16 %v442
        %v1442 = vunpack.c.l.b16 %v443
        %v1443 = vunpack.c.h.b16 %v443
        %v1444 = vunpack.c.l.b16 %v444
        %v1445 = vunpack.c.h.b16 %v444
        %v1446 = vunpack.c.l.b16 %v445
        %v1447 = vunpack.c.h.b16 %v445
        %v1448 = vunpack.c.l.b16 %v446
        %v1449 = vunpack.c.h.b16 %v446
        %v1450 = vunpack.c.l.b16 %v447
        %v1451 = vunpack.c.h.b16 %v447
        %v1452 = vunpack.c.l.b16 %v448
        %v1453 = vunpack.c.h.b16 %v448
        %v1454 = vunpack.c.l.b16 %v449
        %v1455 = vunpack.c.h.b16 %v449
        %v1456 = vunpack.c.l.b16 %v450
        %v1457 = vunpack.c.h.b16 %v450
        %v1458 = vunpack.c.l.b16 %v451
        %v1459 = vunpack.c.h.b16 %v451
        %v1460 = vunpack.c.l.b16 %v452
        %v1461 = vunpack.c.h.b16 %v452
        %v1462 = vunpack.c.l.b16 %v453
        %v1463 = vunpack.c.h.b16 %v453
        %v1464 = vunpack.c.l.b16 %v454
        %v1465 = vunpack.c.h.b16 %v454
        %v1466 = vunpack.c.l.b16 %v455
        %v1467 = vunpack.c.h.b16 %v455
        %v1468 = vunpack.c.l.b16 %v456
        %v1469 = vunpack.c.h.b16 %v456
        %v1470 = vunpack.c.l.b16 %v457
        %v1471 = vunpack.c.h.b16 %v457
        %v1472 = vunpack.c.l.b16 %v458
        %v1473 = vunpack.c.h.b16 %v458
        %v1474 = vunpack.c.l.b16 %v459
        %v1475 = vunpack.c.h.b16 %v459
        %v1476 = vunpack.c.l.b16 %v460
        %v1477 = vunpack.c.h.b16 %v460
        %v1478 = vunpack.c.l.b16 %v461
        %v1479 = vunpack.c.h.b16 %v461
        %v1480 = vunpack.c.l.b16 %v462
        %v1481 = vunpack.c.h.b16 %v462
        %v1482 = vunpack.c.l.b16 %v463
        %v1483 = vunpack.c.h.b16 %v463
        %v1484 = vunpack.c.l.b16 %v464
        %v1485 = vunpack.c.h.b16 %v464
        %v1486 = vunpack.c.l.b16 %v465
        %v1487 = vunpack.c.h.b16 %v465
        %v1488 = vunpack.c.l.b16 %v466
        %v1489 = vunpack.c.h.b16 %v466
        %v1490 = vunpack.c.l.b16 %v467
        %v1491 = vunpack.c.h.b16 %v467
        %v1492 = vunpack.c.l.b16 %v468
        %v1493 = vunpack.c.h.b16 %v468
        %v1494 = vunpack.c.l.b16 %v469
        %v1495 = vunpack.c.h.b16 %v469
        %v1496 = vunpack.c.l.b16 %v470
        %v1497 = vunpack.c.h.b16 %v470
        %v1498 = vunpack.c.l.b16 %v471
        %v1499 = vunpack.c.h.b16 %v471
        %v1500 = vunpack.c.l.b16 %v472
        %v1501 = vunpack.c.h.b16 %v472
        %v1502 = vunpack.c.l.b16 %v473
        %v1503 = vunpack.c.h.b16 %v473
        %v1504 = vunpack.c.l.b16 %v474
        %v1505 = vunpack.c.h.b16 %v474
        %v1506 = vunpack.c.l.b16 %v475
        %v1507 = vunpack.c.h.b16 %v475
        %v1508 = vunpack.c.l.b16 %v476
        %v1509 = vunpack.c.h.b16 %v476
        %v1510 = vunpack.c.l.b16 %v477
        %v1511 = vunpack.c.h.b16 %v477
        %v1512 = vunpack.c.l.b16 %v478
        %v1513 = vunpack.c.h.b16 %v478
        %v1514 = vunpack.c.l.b16 %v479
        %v1515 = vunpack.c.h.b16 %v479
        %v1516 = vunpack.c.l.b16 %v480
        %v1517 = vunpack.c.h.b16 %v480
        %v1518 = vunpack.c.l.b16 %v481
        %v1519 = vunpack.c.h.b16 %v481
        %v1520 = vunpack.c.l.b16 %v482
        %v1521 = vunpack.c.h.b16 %v482
        %v1522 = vunpack.c.l.b16 %v483
        %v1523 = vunpack.c.h.b16 %v483
        %v1524 = vunpack.c.l.b16 %v484
        %v1525 = vunpack.c.h.b16 %v484
        %v1526 = vunpack.c.l.b16 %v485
        %v1527 = vunpack.c.h.b16 %v485
        %v1528 = vunpack.c.l.b16 %v486
        %v1529 = vunpack.c.h.b16 %v486
        %v1530 = vunpack.c.l.b16 %v487
        %v1531 = vunpack.c.h.b16 %v487
        %v1532 = vunpack.c.l.b16 %v488
        %v1533 = vunpack.c.h.b16 %v488
        %v1534 = vunpack.c.l.b16 %v489
        %v1535 = vunpack.c.h.b16 %v489
        %v1536 = vunpack.c.l.b16 %v490
        %v1537 = vunpack.c.h.b16 %v490
        %v1538 = vunpack.c.l.b16 %v491
        %v1539 = vunpack.c.h.b16 %v491
        %v1540 = vunpack.c.l.b16 %v492
        %v1541 = vunpack.c.h.b16 %v492
        %v1542 = vunpack.c.l.b16 %v493
        %v1543 = vunpack.c.h.b16 %v493
        %v1544 = vunpack.c.l.b16 %v494
        %v1545 = vunpack.c.h.b16 %v494
        %v1546 = vunpack.c.l.b16 %v495
        %v1547 = vunpack.c.h.b16 %v495
        %v1548 = vunpack.c.l.b16 %v496
        %v1549 = vunpack.c.h.b16 %v496
        %v1550 = vunpack.c.l.b16 %v497
        %v1551 = vunpack.c.h.b16 %v497
        %v1552 = vunpack.c.l.b16 %v498
        %v1553 = vunpack.c.h.b16 %v498
        %v1554 = vunpack.c.l.b16 %v499
        %v1555 = vunpack.c.h.b16 %v499
        %v1556 = vunpack.c.l.b16 %v500
        %v1557 = vunpack.c.h.b16 %v500
        %v1558 = vunpack.c.l.b16 %v501
        %v1559 = vunpack.c.h.b16 %v501
        %v1560 = vunpack.c.l.b16 %v502
        %v1561 = vunpack.c.h.b16 %v502
        %v1562 = vunpack.c.l.b16 %v503
        %v1563 = vunpack.c.h.b16 %v503
        %v1564 = vunpack.c.l.b16 %v504
        %v1565 = vunpack.c.h.b16 %v504
        %v1566 = vunpack.c.l.b16 %v505
        %v1567 = vunpack.c.h.b16 %v505
        %v1568 = vunpack.c.l.b16 %v506
        %v1569 = vunpack.c.h.b16 %v506
        %v1570 = vunpack.c.l.b16 %v507
        %v1571 = vunpack.c.h.b16 %v507
        %v1572 = vunpack.c.l.b16 %v508
        %v1573 = vunpack.c.h.b16 %v508
        %v1574 = vunpack.c.l.b16 %v509
        %v1575 = vunpack.c.h.b16 %v509
        %v1576 = vunpack.c.l.b16 %v510
        %v1577 = vunpack.c.h.b16 %v510
        %v1578 = vunpack.c.l.b16 %v511
        %v1579 = vunpack.c.h.b16 %v511
        %v1580 = vunpack.c.l.b16 %v512
        %v1581 = vunpack.c.h.b16 %v512
        %v1582 = vunpack.c.l.b16 %v513
        %v1583 = vunpack.c.h.b16 %v513
        %v1584 = vunpack.c.l.b16 %v514
        %v1585 = vunpack.c.h.b16 %v514
        %v1586 = vunpack.c.l.b16 %v515
        %v1587 = vunpack.c.h.b16 %v515
        %v1588 = vunpack.c.l.b16 %v516
        %v1589 = vunpack.c.h.b16 %v516
        %v1590 = vunpack.c.l.b16 %v517
        %v1591 = vunpack.c.h.b16 %v517
        %v1592 = vunpack.c.l.b16 %v518
        %v1593 = vunpack.c.h.b16 %v518
        %v1594 = vunpack.c.l.b16 %v519
        %v1595 = vunpack.c.h.b16 %v519
        %v1596 = vunpack.c.l.b16 %v520
        %v1597 = vunpack.c.h.b16 %v520
        %v1598 = vunpack.c.l.b16 %v521
        %v1599 = vunpack.c.h.b16 %v521
        %v1600 = vunpack.c.l.b16 %v522
        %v1601 = vunpack.c.h.b16 %v522
        %v1602 = vunpack.c.l.b16 %v523
        %v1603 = vunpack.c.h.b16 %v523
        %v1604 = vunpack.c.l.b16 %v524
        %v1605 = vunpack.c.h.b16 %v524
        %v1606 = vunpack.c.l.b16 %v525
        %v1607 = vunpack.c.h.b16 %v525
        %v1608 = vunpack.c.l.b16 %v526
        %v1609 = vunpack.c.h.b16 %v526
        %v1610 = vunpack.c.l.b16 %v527
        %v1611 = vunpack.c.h.b16 %v527
        %v1612 = vunpack.c.l.b16 %v528
        %v1613 = vunpack.c.h.b16 %v528
        %v1614 = vunpack.c.l.b16 %v529
        %v1615 = vunpack.c.h.b16 %v529
        %v1616 = vunpack.c.l.b16 %v530
        %v1617 = vunpack.c.h.b16 %v530
        %v1618 = vunpack.c.l.b16 %v531
        %v1619 = vunpack.c.h.b16 %v531
        %v1620 = vunpack.c.l.b16 %v532
        %v1621 = vunpack.c.h.b16 %v532
        %v1622 = vunpack.c.l.b16 %v533
        %v1623 = vunpack.c.h.b16 %v533
        %v1624 = vunpack.c.l.b16 %v534
        %v1625 = vunpack.c.h.b16 %v534
        %v1626 = vunpack.c.l.b16 %v535
        %v1627 = vunpack.c.h.b16 %v535
        %v1628 = vunpack.c.l.b16 %v536
        %v1629 = vunpack.c.h.b16 %v536
        %v1630 = vunpack.c.l.b16 %v537
        %v1631 = vunpack.c.h.b16 %v537
        %v1632 = vunpack.c.l.b16 %v538
        %v1633 = vunpack.c.h.b16 %v538
        %v1634 = vunpack.c.l.b16 %v539
        %v1635 = vunpack.c.h.b16 %v539
        %v1636 = vunpack.c.l.b16 %v540
        %v1637 = vunpack.c.h.b16 %v540
        %v1638 = vunpack.c.l.b16 %v541
        %v1639 = vunpack.c.h.b16 %v541
        %v1640 = vunpack.c.l.b16 %v542
        %v1641 = vunpack.c.h.b16 %v542
        %v1642 = vunpack.c.l.b16 %v543
        %v1643 = vunpack.c.h.b16 %v543
        %v1644 = vunpack.c.l.b16 %v544
        %v1645 = vunpack.c.h.b16 %v544
        %v1646 = vunpack.c.l.b16 %v545
        %v1647 = vunpack.c.h.b16 %v545
        %v1648 = vunpack.c.l.b16 %v546
        %v1649 = vunpack.c.h.b16 %v546
        %v1650 = vunpack.c.l.b16 %v547
        %v1651 = vunpack.c.h.b16 %v547
        %v1652 = vunpack.c.l.b16 %v548
        %v1653 = vunpack.c.h.b16 %v548
        %v1654 = vunpack.c.l.b16 %v549
        %v1655 = vunpack.c.h.b16 %v549
        %v1656 = vunpack.c.l.b16 %v550
        %v1657 = vunpack.c.h.b16 %v550
        %v1658 = vunpack.c.l.b16 %v551
        %v1659 = vunpack.c.h.b16 %v551
        %v1660 = vunpack.c.l.b16 %v552
        %v1661 = vunpack.c.h.b16 %v552
        %v1662 = vunpack.c.l.b16 %v553
        %v1663 = vunpack.c.h.b16 %v553
        %v1664 = vunpack.c.l.b16 %v554
        %v1665 = vunpack.c.h.b16 %v554
        %v1666 = vunpack.c.l.b16 %v555
        %v1667 = vunpack.c.h.b16 %v555
        %v1668 = vunpack.c.l.b16 %v556
        %v1669 = vunpack.c.h.b16 %v556
        %v1670 = vunpack.c.l.b16 %v557
        %v1671 = vunpack.c.h.b16 %v557
        %v1672 = vunpack.c.l.b16 %v558
        %v1673 = vunpack.c.h.b16 %v558
        %v1674 = vunpack.c.l.b16 %v559
        %v1675 = vunpack.c.h.b16 %v559
        %v1676 = vunpack.c.l.b16 %v560
        %v1677 = vunpack.c.h.b16 %v560
        %v1678 = vunpack.c.l.b16 %v561
        %v1679 = vunpack.c.h.b16 %v561
        %v1680 = vunpack.c.l.b16 %v562
        %v1681 = vunpack.c.h.b16 %v562
        %v1682 = vunpack.c.l.b16 %v563
        %v1683 = vunpack.c.h.b16 %v563
        %v1684 = vunpack.c.l.b16 %v564
        %v1685 = vunpack.c.h.b16 %v564
        %v1686 = vunpack.c.l.b16 %v565
        %v1687 = vunpack.c.h.b16 %v565
        %v1688 = vunpack.c.l.b16 %v566
        %v1689 = vunpack.c.h.b16 %v566
        %v1690 = vunpack.c.l.b16 %v567
        %v1691 = vunpack.c.h.b16 %v567
        %v1692 = vunpack.c.l.b16 %v568
        %v1693 = vunpack.c.h.b16 %v568
        %v1694 = vunpack.c.l.b16 %v569
        %v1695 = vunpack.c.h.b16 %v569
        %v1696 = vunpack.c.l.b16 %v570
        %v1697 = vunpack.c.h.b16 %v570
        %v1698 = vunpack.c.l.b16 %v571
        %v1699 = vunpack.c.h.b16 %v571
        %v1700 = vunpack.c.l.b16 %v572
        %v1701 = vunpack.c.h.b16 %v572
        %v1702 = vunpack.c.l.b16 %v573
        %v1703 = vunpack.c.h.b16 %v573
        %v1704 = vunpack.c.l.b16 %v574
        %v1705 = vunpack.c.h.b16 %v574
        %v1706 = vunpack.c.l.b16 %v575
        %v1707 = vunpack.c.h.b16 %v575
        %v1708 = vunpack.c.l.b16 %v576
        %v1709 = vunpack.c.h.b16 %v576
        %v1710 = vunpack.c.l.b16 %v577
        %v1711 = vunpack.c.h.b16 %v577
        %v1712 = vunpack.c.l.b16 %v578
        %v1713 = vunpack.c.h.b16 %v578
        %v1714 = vunpack.c.l.b16 %v579
        %v1715 = vunpack.c.h.b16 %v579
        %v1716 = vunpack.c.l.b16 %v580
        %v1717 = vunpack.c.h.b16 %v580
        %v1718 = vunpack.c.l.b16 %v581
        %v1719 = vunpack.c.h.b16 %v581
        %v1720 = vunpack.c.l.b16 %v582
        %v1721 = vunpack.c.h.b16 %v582
        %v1722 = vunpack.c.l.b16 %v583
        %v1723 = vunpack.c.h.b16 %v583
        %v1724 = vunpack.c.l.b16 %v584
        %v1725 = vunpack.c.h.b16 %v584
        %v1726 = vunpack.c.l.b16 %v585
        %v1727 = vunpack.c.h.b16 %v585
        %v1728 = vunpack.c.l.b16 %v586
        %v1729 = vunpack.c.h.b16 %v586
        %v1730 = vunpack.c.l.b16 %v587
        %v1731 = vunpack.c.h.b16 %v587
        %v1732 = vunpack.c.l.b16 %v588
        %v1733 = vunpack.c.h.b16 %v588
        %v1734 = vunpack.c.l.b16 %v589
        %v1735 = vunpack.c.h.b16 %v589
        %v1736 = vunpack.c.l.b16 %v590
        %v1737 = vunpack.c.h.b16 %v590
        %v1738 = vunpack.c.l.b16 %v591
        %v1739 = vunpack.c.h.b16 %v591
        %v1740 = vunpack.c.l.b16 %v592
        %v1741 = vunpack.c.h.b16 %v592
        %v1742 = vunpack.c.l.b16 %v593
        %v1743 = vunpack.c.h.b16 %v593
        %v1744 = vunpack.c.l.b16 %v594
        %v1745 = vunpack.c.h.b16 %v594
        %v1746 = vunpack.c.l.b16 %v595
        %v1747 = vunpack.c.h.b16 %v595
        %v1748 = vunpack.c.l.b16 %v596
        %v1749 = vunpack.c.h.b16 %v596
        %v1750 = vunpack.c.l.b16 %v597
        %v1751 = vunpack.c.h.b16 %v597
        %v1752 = vunpack.c.l.b16 %v598
        %v1753 = vunpack.c.h.b16 %v598
        %v1754 = vunpack.c.l.b16 %v599
        %v1755 = vunpack.c.h.b16 %v599
        %v1756 = vunpack.c.l.b16 %v600
        %v1757 = vunpack.c.h.b16 %v600
        %v1758 = vunpack.c.l.b16 %v601
        %v1759 = vunpack.c.h.b16 %v601
        %v1760 = vunpack.c.l.b16 %v602
        %v1761 = vunpack.c.h.b16 %v602
        %v1762 = vunpack.c.l.b16 %v603
        %v1763 = vunpack.c.h.b16 %v603
        %v1764 = vunpack.c.l.b16 %v604
        %v1765 = vunpack.c.h.b16 %v604
        %v1766 = vunpack.c.l.b16 %v605
        %v1767 = vunpack.c.h.b16 %v605
        %v1768 = vunpack.c.l.b16 %v606
        %v1769 = vunpack.c.h.b16 %v606
        %v1770 = vunpack.c.l.b16 %v607
        %v1771 = vunpack.c.h.b16 %v607
        %v1772 = vunpack.c.l.b16 %v608
        %v1773 = vunpack.c.h.b16 %v608
        %v1774 = vunpack.c.l.b16 %v609
        %v1775 = vunpack.c.h.b16 %v609
        %v1776 = vunpack.c.l.b16 %v610
        %v1777 = vunpack.c.h.b16 %v610
        %v1778 = vunpack.c.l.b16 %v611
        %v1779 = vunpack.c.h.b16 %v611
        %v1780 = vunpack.c.l.b16 %v612
        %v1781 = vunpack.c.h.b16 %v612
        %v1782 = vunpack.c.l.b16 %v613
        %v1783 = vunpack.c.h.b16 %v613
        %v1784 = vunpack.c.l.b16 %v614
        %v1785 = vunpack.c.h.b16 %v614
        %v1786 = vunpack.c.l.b16 %v615
        %v1787 = vunpack.c.h.b16 %v615
        %v1788 = vunpack.c.l.b16 %v616
        %v1789 = vunpack.c.h.b16 %v616
        %v1790 = vunpack.c.l.b16 %v617
        %v1791 = vunpack.c.h.b16 %v617
        %v1792 = vunpack.c.l.b16 %v618
        %v1793 = vunpack.c.h.b16 %v618
        %v1794 = vunpack.c.l.b16 %v619
        %v1795 = vunpack.c.h.b16 %v619
        %v1796 = vunpack.c.l.b16 %v620
        %v1797 = vunpack.c.h.b16 %v620
        %v1798 = vunpack.c.l.b16 %v621
        %v1799 = vunpack.c.h.b16 %v621
        %v1800 = vunpack.c.l.b16 %v622
        %v1801 = vunpack.c.h.b16 %v622
        %v1802 = vunpack.c.l.b16 %v623
        %v1803 = vunpack.c.h.b16 %v623
        %v1804 = vunpack.c.l.b16 %v624
        %v1805 = vunpack.c.h.b16 %v624
        %v1806 = vunpack.c.l.b16 %v625
        %v1807 = vunpack.c.h.b16 %v625
        %v1808 = vunpack.c.l.b16 %v626
        %v1809 = vunpack.c.h.b16 %v626
        %v1810 = vunpack.c.l.b16 %v627
        %v1811 = vunpack.c.h.b16 %v627
        %v1812 = vunpack.c.l.b16 %v628
        %v1813 = vunpack.c.h.b16 %v628
        %v1814 = vunpack.c.l.b16 %v629
        %v1815 = vunpack.c.h.b16 %v629
        %v1816 = vunpack.c.l.b16 %v630
        %v1817 = vunpack.c.h.b16 %v630
        %v1818 = vunpack.c.l.b16 %v631
        %v1819 = vunpack.c.h.b16 %v631
        %v1820 = vunpack.c.l.b16 %v632
        %v1821 = vunpack.c.h.b16 %v632
        %v1822 = vunpack.c.l.b16 %v633
        %v1823 = vunpack.c.h.b16 %v633
        %v1824 = vunpack.c.l.b16 %v634
        %v1825 = vunpack.c.h.b16 %v634
        %v1826 = vunpack.c.l.b16 %v635
        %v1827 = vunpack.c.h.b16 %v635
        %v1828 = vunpack.c.l.b16 %v636
        %v1829 = vunpack.c.h.b16 %v636
        %v1830 = vunpack.c.l.b16 %v637
        %v1831 = vunpack.c.h.b16 %v637
        %v1832 = vunpack.c.l.b16 %v638
        %v1833 = vunpack.c.h.b16 %v638
        %v1834 = vunpack.c.l.b16 %v639
        %v1835 = vunpack.c.h.b16 %v639
        %v1836 = vunpack.c.l.b16 %v640
        %v1837 = vunpack.c.h.b16 %v640
        %v1838 = vunpack.c.l.b16 %v641
        %v1839 = vunpack.c.h.b16 %v641
        %v1840 = vunpack.c.l.b16 %v642
        %v1841 = vunpack.c.h.b16 %v642
        %v1842 = vunpack.c.l.b16 %v643
        %v1843 = vunpack.c.h.b16 %v643
        %v1844 = vunpack.c.l.b16 %v644
        %v1845 = vunpack.c.h.b16 %v644
        %v1846 = vunpack.c.l.b16 %v645
        %v1847 = vunpack.c.h.b16 %v645
        %v1848 = vunpack.c.l.b16 %v646
        %v1849 = vunpack.c.h.b16 %v646
        %v1850 = vunpack.c.l.b16 %v647
        %v1851 = vunpack.c.h.b16 %v647
        %v1852 = vunpack.c.l.b16 %v648
        %v1853 = vunpack.c.h.b16 %v648
        %v1854 = vunpack.c.l.b16 %v649
        %v1855 = vunpack.c.h.b16 %v649
        %v1856 = vunpack.c.l.b16 %v650
        %v1857 = vunpack.c.h.b16 %v650
        %v1858 = vunpack.c.l.b16 %v651
        %v1859 = vunpack.c.h.b16 %v651
        %v1860 = vunpack.c.l.b16 %v652
        %v1861 = vunpack.c.h.b16 %v652
        %v1862 = vunpack.c.l.b16 %v653
        %v1863 = vunpack.c.h.b16 %v653
        %v1864 = vunpack.c.l.b16 %v654
        %v1865 = vunpack.c.h.b16 %v654
        %v1866 = vunpack.c.l.b16 %v655
        %v1867 = vunpack.c.h.b16 %v655
        %v1868 = vunpack.c.l.b16 %v656
        %v1869 = vunpack.c.h.b16 %v656
        %v1870 = vunpack.c.l.b16 %v657
        %v1871 = vunpack.c.h.b16 %v657
        %v1872 = vunpack.c.l.b16 %v658
        %v1873 = vunpack.c.h.b16 %v658
        %v1874 = vunpack.c.l.b16 %v659
        %v1875 = vunpack.c.h.b16 %v659
        %v1876 = vunpack.c.l.b16 %v660
        %v1877 = vunpack.c.h.b16 %v660
        %v1878 = vunpack.c.l.b16 %v661
        %v1879 = vunpack.c.h.b16 %v661
        %v1880 = vunpack.c.l.b16 %v662
        %v1881 = vunpack.c.h.b16 %v662
        %v1882 = vunpack.c.l.b16 %v663
        %v1883 = vunpack.c.h.b16 %v663
        %v1884 = vunpack.c.l.b16 %v664
        %v1885 = vunpack.c.h.b16 %v664
        %v1886 = vunpack.c.l.b16 %v665
        %v1887 = vunpack.c.h.b16 %v665
        %v1888 = vunpack.c.l.b16 %v666
        %v1889 = vunpack.c.h.b16 %v666
        %v1890 = vunpack.c.l.b16 %v667
        %v1891 = vunpack.c.h.b16 %v667
        %v1892 = vunpack.c.l.b16 %v668
        %v1893 = vunpack.c.h.b16 %v668
        %v1894 = vunpack.c.l.b16 %v669
        %v1895 = vunpack.c.h.b16 %v669
        %v1896 = vunpack.c.l.b16 %v670
        %v1897 = vunpack.c.h.b16 %v670
        %v1898 = vunpack.c.l.b16 %v671
        %v1899 = vunpack.c.h.b16 %v671
        %v1900 = vunpack.c.l.b16 %v672
        %v1901 = vunpack.c.h.b16 %v672
        %v1902 = vunpack.c.l.b16 %v673
        %v1903 = vunpack.c.h.b16 %v673
        %v1904 = vunpack.c.l.b16 %v674
        %v1905 = vunpack.c.h.b16 %v674
        %v1906 = vunpack.c.l.b16 %v675
        %v1907 = vunpack.c.h.b16 %v675
        %v1908 = vunpack.c.l.b16 %v676
        %v1909 = vunpack.c.h.b16 %v676
        %v1910 = vunpack.c.l.b16 %v677
        %v1911 = vunpack.c.h.b16 %v677
        %v1912 = vunpack.c.l.b16 %v678
        %v1913 = vunpack.c.h.b16 %v678
        %v1914 = vunpack.c.l.b16 %v679
        %v1915 = vunpack.c.h.b16 %v679
        %v1916 = vunpack.c.l.b16 %v680
        %v1917 = vunpack.c.h.b16 %v680
        %v1918 = vunpack.c.l.b16 %v681
        %v1919 = vunpack.c.h.b16 %v681
        %v1920 = vunpack.c.l.b16 %v682
        %v1921 = vunpack.c.h.b16 %v682
        %v1922 = vunpack.c.l.b16 %v683
        %v1923 = vunpack.c.h.b16 %v683
        %v1924 = vunpack.c.l.b16 %v684
        %v1925 = vunpack.c.h.b16 %v684
        %v1926 = vunpack.c.l.b16 %v685
        %v1927 = vunpack.c.h.b16 %v685
        %v1928 = vunpack.c.l.b16 %v686
        %v1929 = vunpack.c.h.b16 %v686
        %v1930 = vunpack.c.l.b16 %v687
        %v1931 = vunpack.c.h.b16 %v687
        %v1932 = vunpack.c.l.b16 %v688
        %v1933 = vunpack.c.h.b16 %v688
        %v1934 = vunpack.c.l.b16 %v689
        %v1935 = vunpack.c.h.b16 %v689
        %v1936 = vunpack.c.l.b16 %v690
        %v1937 = vunpack.c.h.b16 %v690
        %v1938 = vunpack.c.l.b16 %v691
        %v1939 = vunpack.c.h.b16 %v691
        %v1940 = vpack.c.b16 %v1174, %v1172
        %v1941 = vpack.c.b16 %v1175, %v1173
        %v1942 = vpack.c.b16 %v1178, %v1176
        %v1943 = vpack.c.b16 %v1179, %v1177
        %v1944 = vpack.c.b16 %v1182, %v1180
        %v1945 = vpack.c.b16 %v1183, %v1181
        %v1946 = vpack.c.b16 %v1186, %v1184
        %v1947 = vpack.c.b16 %v1187, %v1185
        %v1948 = vpack.c.b16 %v1190, %v1188
        %v1949 = vpack.c.b16 %v1191, %v1189
        %v1950 = vpack.c.b16 %v1194, %v1192
        %v1951 = vpack.c.b16 %v1195, %v1193
        %v1952 = vpack.c.b16 %v1198, %v1196
        %v1953 = vpack.c.b16 %v1199, %v1197
        %v1954 = vpack.c.b16 %v1202, %v1200
        %v1955 = vpack.c.b16 %v1203, %v1201
        %v1956 = vpack.c.b16 %v1206, %v1204
        %v1957 = vpack.c.b16 %v1207, %v1205
        %v1958 = vpack.c.b16 %v1210, %v1208
        %v1959 = vpack.c.b16 %v1211, %v1209
        %v1960 = vpack.c.b16 %v1214, %v1212
        %v1961 = vpack.c.b16 %v1215, %v1213
        %v1962 = vpack.c.b16 %v1218, %v1216
        %v1963 = vpack.c.b16 %v1219, %v1217
        %v1964 = vpack.c.b16 %v1222, %v1220
        %v1965 = vpack.c.b16 %v1223, %v1221
        %v1966 = vpack.c.b16 %v1226, %v1224
        %v1967 = vpack.c.b16 %v1227, %v1225
        %v1968 = vpack.c.b16 %v1230, %v1228
        %v1969 = vpack.c.b16 %v1231, %v1229
        %v1970 = vpack.c.b16 %v1234, %v1232
        %v1971 = vpack.c.b16 %v1235, %v1233
        %v1972 = vpack.c.b16 %v1238, %v1236
        %v1973 = vpack.c.b16 %v1239, %v1237
        %v1974 = vpack.c.b16 %v1242, %v1240
        %v1975 = vpack.c.b16 %v1243, %v1241
        %v1976 = vpack.c.b16 %v1246, %v1244
        %v1977 = vpack.c.b16 %v1247, %v1245
        %v1978 = vpack.c.b16 %v1250, %v1248
        %v1979 = vpack.c.b16 %v1251, %v1249
        %v1980 = vpack.c.b16 %v1254, %v1252
        %v1981 = vpack.c.b16 %v1255, %v1253
        %v1982 = vpack.c.b16 %v1258, %v1256
        %v1983 = vpack.c.b16 %v1259, %v1257
        %v1984 = vpack.c.b16 %v1262, %v1260
        %v1985 = vpack.c.b16 %v1263, %v1261
        %v1986 = vpack.c.b16 %v1266, %v1264
        %v1987 = vpack.c.b16 %v1267, %v1265
        %v1988 = vpack.c.b16 %v1270, %v1268
        %v1989 = vpack.c.b16 %v1271, %v1269
        %v1990 = vpack.c.b16 %v1274, %v1272
        %v1991 = vpack.c.b16 %v1275, %v1273
        %v1992 = vpack.c.b16 %v1278, %v1276
        %v1993 = vpack.c.b16 %v1279, %v1277
        %v1994 = vpack.c.b16 %v1282, %v1280
        %v1995 = vpack.c.b16 %v1283, %v1281
        %v1996 = vpack.c.b16 %v1286, %v1284
        %v1997 = vpack.c.b16 %v1287, %v1285
        %v1998 = vpack.c.b16 %v1290, %v1288
        %v1999 = vpack.c.b16 %v1291, %v1289
        %v2000 = vpack.c.b16 %v1294, %v1292
        %v2001 = vpack.c.b16 %v1295, %v1293
        %v2002 = vpack.c.b16 %v1298, %v1296
        %v2003 = vpack.c.b16 %v1299, %v1297
        %v2004 = vpack.c.b16 %v1302, %v1300
        %v2005 = vpack.c.b16 %v1303, %v1301
        %v2006 = vpack.c.b16 %v1306, %v1304
        %v2007 = vpack.c.b16 %v1307, %v1305
        %v2008 = vpack.c.b16 %v1310, %v1308
        %v2009 = vpack.c.b16 %v1311, %v1309
        %v2010 = vpack.c.b16 %v1314, %v1312
        %v2011 = vpack.c.b16 %v1315, %v1313
        %v2012 = vpack.c.b16 %v1318, %v1316
        %v2013 = vpack.c.b16 %v1319, %v1317
        %v2014 = vpack.c.b16 %v1322, %v1320
        %v2015 = vpack.c.b16 %v1323, %v1321
        %v2016 = vpack.c.b16 %v1326, %v1324
        %v2017 = vpack.c.b16 %v1327, %v1325
        %v2018 = vpack.c.b16 %v1330, %v1328
        %v2019 = vpack.c.b16 %v1331, %v1329
        %v2020 = vpack.c.b16 %v1334, %v1332
        %v2021 = vpack.c.b16 %v1335, %v1333
        %v2022 = vpack.c.b16 %v1338, %v1336
        %v2023 = vpack.c.b16 %v1339, %v1337
        %v2024 = vpack.c.b16 %v1342, %v1340
        %v2025 = vpack.c.b16 %v1343, %v1341
        %v2026 = vpack.c.b16 %v1346, %v1344
        %v2027 = vpack.c.b16 %v1347, %v1345
        %v2028 = vpack.c.b16 %v1350, %v1348
        %v2029 = vpack.c.b16 %v1351, %v1349
        %v2030 = vpack.c.b16 %v1354, %v1352
        %v2031 = vpack.c.b16 %v1355, %v1353
        %v2032 = vpack.c.b16 %v1358, %v1356
        %v2033 = vpack.c.b16 %v1359, %v1357
        %v2034 = vpack.c.b16 %v1362, %v1360
        %v2035 = vpack.c.b16 %v1363, %v1361
        %v2036 = vpack.c.b16 %v1366, %v1364
        %v2037 = vpack.c.b16 %v1367, %v1365
        %v2038 = vpack.c.b16 %v1370, %v1368
        %v2039 = vpack.c.b16 %v1371, %v1369
        %v2040 = vpack.c.b16 %v1374, %v1372
        %v2041 = vpack.c.b16 %v1375, %v1373
        %v2042 = vpack.c.b16 %v1378, %v1376
        %v2043 = vpack.c.b16 %v1379, %v1377
        %v2044 = vpack.c.b16 %v1382, %v1380
        %v2045 = vpack.c.b16 %v1383, %v1381
        %v2046 = vpack.c.b16 %v1386, %v1384
        %v2047 = vpack.c.b16 %v1387, %v1385
        %v2048 = vpack.c.b16 %v1390, %v1388
        %v2049 = vpack.c.b16 %v1391, %v1389
        %v2050 = vpack.c.b16 %v1394, %v1392
        %v2051 = vpack.c.b16 %v1395, %v1393
        %v2052 = vpack.c.b16 %v1398, %v1396
        %v2053 = vpack.c.b16 %v1399, %v1397
        %v2054 = vpack.c.b16 %v1402, %v1400
        %v2055 = vpack.c.b16 %v1403, %v1401
        %v2056 = vpack.c.b16 %v1406, %v1404
        %v2057 = vpack.c.b16 %v1407, %v1405
        %v2058 = vpack.c.b16 %v1410, %v1408
        %v2059 = vpack.c.b16 %v1411, %v1409
        %v2060 = vpack.c.b16 %v1414, %v1412
        %v2061 = vpack.c.b16 %v1415, %v1413
        %v2062 = vpack.c.b16 %v1418, %v1416
        %v2063 = vpack.c.b16 %v1419, %v1417
        %v2064 = vpack.c.b16 %v1422, %v1420
        %v2065 = vpack.c.b16 %v1423, %v1421
        %v2066 = vpack.c.b16 %v1426, %v1424
        %v2067 = vpack.c.b16 %v1427, %v1425
        %v2068 = vpack.c.b16 %v1430, %v1428
        %v2069 = vpack.c.b16 %v1431, %v1429
        %v2070 = vpack.c.b16 %v1434, %v1432
        %v2071 = vpack.c.b16 %v1435, %v1433
        %v2072 = vpack.c.b16 %v1438, %v1436
        %v2073 = vpack.c.b16 %v1439, %v1437
        %v2074 = vpack.c.b16 %v1442, %v1440
        %v2075 = vpack.c.b16 %v1443, %v1441
        %v2076 = vpack.c.b16 %v1446, %v1444
        %v2077 = vpack.c.b16 %v1447, %v1445
        %v2078 = vpack.c.b16 %v1450, %v1448
        %v2079 = vpack.c.b16 %v1451, %v1449
        %v2080 = vpack.c.b16 %v1454, %v1452
        %v2081 = vpack.c.b16 %v1455, %v1453
        %v2082 = vpack.c.b16 %v1458, %v1456
        %v2083 = vpack.c.b16 %v1459, %v1457
        %v2084 = vpack.c.b16 %v1462, %v1460
        %v2085 = vpack.c.b16 %v1463, %v1461
        %v2086 = vpack.c.b16 %v1466, %v1464
        %v2087 = vpack.c.b16 %v1467, %v1465
        %v2088 = vpack.c.b16 %v1470, %v1468
        %v2089 = vpack.c.b16 %v1471, %v1469
        %v2090 = vpack.c.b16 %v1474, %v1472
        %v2091 = vpack.c.b16 %v1475, %v1473
        %v2092 = vpack.c.b16 %v1478, %v1476
        %v2093 = vpack.c.b16 %v1479, %v1477
        %v2094 = vpack.c.b16 %v1482, %v1480
        %v2095 = vpack.c.b16 %v1483, %v1481
        %v2096 = vpack.c.b16 %v1486, %v1484
        %v2097 = vpack.c.b16 %v1487, %v1485
        %v2098 = vpack.c.b16 %v1490, %v1488
        %v2099 = vpack.c.b16 %v1491, %v1489
        %v2100 = vpack.c.b16 %v1494, %v1492
        %v2101 = vpack.c.b16 %v1495, %v1493
        %v2102 = vpack.c.b16 %v1498, %v1496
        %v2103 = vpack.c.b16 %v1499, %v1497
        %v2104 = vpack.c.b16 %v1502, %v1500
        %v2105 = vpack.c.b16 %v1503, %v1501
        %v2106 = vpack.c.b16 %v1506, %v1504
        %v2107 = vpack.c.b16 %v1507, %v1505
        %v2108 = vpack.c.b16 %v1510, %v1508
        %v2109 = vpack.c.b16 %v1511, %v1509
        %v2110 = vpack.c.b16 %v1514, %v1512
        %v2111 = vpack.c.b16 %v1515, %v1513
        %v2112 = vpack.c.b16 %v1518, %v1516
        %v2113 = vpack.c.b16 %v1519, %v1517
        %v2114 = vpack.c.b16 %v1522, %v1520
        %v2115 = vpack.c.b16 %v1523, %v1521
        %v2116 = vpack.c.b16 %v1526, %v1524
        %v2117 = vpack.c.b16 %v1527, %v1525
        %v2118 = vpack.c.b16 %v1530, %v1528
        %v2119 = vpack.c.b16 %v1531, %v1529
        %v2120 = vpack.c.b16 %v1534, %v1532
        %v2121 = vpack.c.b16 %v1535, %v1533
        %v2122 = vpack.c.b16 %v1538, %v1536
        %v2123 = vpack.c.b16 %v1539, %v1537
        %v2124 = vpack.c.b16 %v1542, %v1540
        %v2125 = vpack.c.b16 %v1543, %v1541
        %v2126 = vpack.c.b16 %v1546, %v1544
        %v2127 = vpack.c.b16 %v1547, %v1545
        %v2128 = vpack.c.b16 %v1550, %v1548
        %v2129 = vpack.c.b16 %v1551, %v1549
        %v2130 = vpack.c.b16 %v1554, %v1552
        %v2131 = vpack.c.b16 %v1555, %v1553
        %v2132 = vpack.c.b16 %v1558, %v1556
        %v2133 = vpack.c.b16 %v1559, %v1557
        %v2134 = vpack.c.b16 %v1562, %v1560
        %v2135 = vpack.c.b16 %v1563, %v1561
        %v2136 = vpack.c.b16 %v1566, %v1564
        %v2137 = vpack.c.b16 %v1567, %v1565
        %v2138 = vpack.c.b16 %v1570, %v1568
        %v2139 = vpack.c.b16 %v1571, %v1569
        %v2140 = vpack.c.b16 %v1574, %v1572
        %v2141 = vpack.c.b16 %v1575, %v1573
        %v2142 = vpack.c.b16 %v1578, %v1576
        %v2143 = vpack.c.b16 %v1579, %v1577
        %v2144 = vpack.c.b16 %v1582, %v1580
        %v2145 = vpack.c.b16 %v1583, %v1581
        %v2146 = vpack.c.b16 %v1586, %v1584
        %v2147 = vpack.c.b16 %v1587, %v1585
        %v2148 = vpack.c.b16 %v1590, %v1588
        %v2149 = vpack.c.b16 %v1591, %v1589
        %v2150 = vpack.c.b16 %v1594, %v1592
        %v2151 = vpack.c.b16 %v1595, %v1593
        %v2152 = vpack.c.b16 %v1598, %v1596
        %v2153 = vpack.c.b16 %v1599, %v1597
        %v2154 = vpack.c.b16 %v1602, %v1600
        %v2155 = vpack.c.b16 %v1603, %v1601
        %v2156 = vpack.c.b16 %v1606, %v1604
        %v2157 = vpack.c.b16 %v1607, %v1605
        %v2158 = vpack.c.b16 %v1610, %v1608
        %v2159 = vpack.c.b16 %v1611, %v1609
        %v2160 = vpack.c.b16 %v1614, %v1612
        %v2161 = vpack.c.b16 %v1615, %v1613
        %v2162 = vpack.c.b16 %v1618, %v1616
        %v2163 = vpack.c.b16 %v1619, %v1617
        %v2164 = vpack.c.b16 %v1622, %v1620
        %v2165 = vpack.c.b16 %v1623, %v1621
        %v2166 = vpack.c.b16 %v1626, %v1624
        %v2167 = vpack.c.b16 %v1627, %v1625
        %v2168 = vpack.c.b16 %v1630, %v1628
        %v2169 = vpack.c.b16 %v1631, %v1629
        %v2170 = vpack.c.b16 %v1634, %v1632
        %v2171 = vpack.c.b16 %v1635, %v1633
        %v2172 = vpack.c.b16 %v1638, %v1636
        %v2173 = vpack.c.b16 %v1639, %v1637
        %v2174 = vpack.c.b16 %v1642, %v1640
        %v2175 = vpack.c.b16 %v1643, %v1641
        %v2176 = vpack.c.b16 %v1646, %v1644
        %v2177 = vpack.c.b16 %v1647, %v1645
        %v2178 = vpack.c.b16 %v1650, %v1648
        %v2179 = vpack.c.b16 %v1651, %v1649
        %v2180 = vpack.c.b16 %v1654, %v1652
        %v2181 = vpack.c.b16 %v1655, %v1653
        %v2182 = vpack.c.b16 %v1658, %v1656
        %v2183 = vpack.c.b16 %v1659, %v1657
        %v2184 = vpack.c.b16 %v1662, %v1660
        %v2185 = vpack.c.b16 %v1663, %v1661
        %v2186 = vpack.c.b16 %v1666, %v1664
        %v2187 = vpack.c.b16 %v1667, %v1665
        %v2188 = vpack.c.b16 %v1670, %v1668
        %v2189 = vpack.c.b16 %v1671, %v1669
        %v2190 = vpack.c.b16 %v1674, %v1672
        %v2191 = vpack.c.b16 %v1675, %v1673
        %v2192 = vpack.c.b16 %v1678, %v1676
        %v2193 = vpack.c.b16 %v1679, %v1677
        %v2194 = vpack.c.b16 %v1682, %v1680
        %v2195 = vpack.c.b16 %v1683, %v1681
        %v2196 = vpack.c.b16 %v1686, %v1684
        %v2197 = vpack.c.b16 %v1687, %v1685
        %v2198 = vpack.c.b16 %v1690, %v1688
        %v2199 = vpack.c.b16 %v1691, %v1689
        %v2200 = vpack.c.b16 %v1694, %v1692
        %v2201 = vpack.c.b16 %v1695, %v1693
        %v2202 = vpack.c.b16 %v1698, %v1696
        %v2203 = vpack.c.b16 %v1699, %v1697
        %v2204 = vpack.c.b16 %v1702, %v1700
        %v2205 = vpack.c.b16 %v1703, %v1701
        %v2206 = vpack.c.b16 %v1706, %v1704
        %v2207 = vpack.c.b16 %v1707, %v1705
        %v2208 = vpack.c.b16 %v1710, %v1708
        %v2209 = vpack.c.b16 %v1711, %v1709
        %v2210 = vpack.c.b16 %v1714, %v1712
        %v2211 = vpack.c.b16 %v1715, %v1713
        %v2212 = vpack.c.b16 %v1718, %v1716
        %v2213 = vpack.c.b16 %v1719, %v1717
        %v2214 = vpack.c.b16 %v1722, %v1720
        %v2215 = vpack.c.b16 %v1723, %v1721
        %v2216 = vpack.c.b16 %v1726, %v1724
        %v2217 = vpack.c.b16 %v1727, %v1725
        %v2218 = vpack.c.b16 %v1730, %v1728
        %v2219 = vpack.c.b16 %v1731, %v1729
        %v2220 = vpack.c.b16 %v1734, %v1732
        %v2221 = vpack.c.b16 %v1735, %v1733
        %v2222 = vpack.c.b16 %v1738, %v1736
        %v2223 = vpack.c.b16 %v1739, %v1737
        %v2224 = vpack.c.b16 %v1742, %v1740
        %v2225 = vpack.c.b16 %v1743, %v1741
        %v2226 = vpack.c.b16 %v1746, %v1744
        %v2227 = vpack.c.b16 %v1747, %v1745
        %v2228 = vpack.c.b16 %v1750, %v1748
        %v2229 = vpack.c.b16 %v1751, %v1749
        %v2230 = vpack.c.b16 %v1754, %v1752
        %v2231 = vpack.c.b16 %v1755, %v1753
        %v2232 = vpack.c.b16 %v1758, %v1756
        %v2233 = vpack.c.b16 %v1759, %v1757
        %v2234 = vpack.c.b16 %v1762, %v1760
        %v2235 = vpack.c.b16 %v1763, %v1761
        %v2236 = vpack.c.b16 %v1766, %v1764
        %v2237 = vpack.c.b16 %v1767, %v1765
        %v2238 = vpack.c.b16 %v1770, %v1768
        %v2239 = vpack.c.b16 %v1771, %v1769
        %v2240 = vpack.c.b16 %v1774, %v1772
        %v2241 = vpack.c.b16 %v1775, %v1773
        %v2242 = vpack.c.b16 %v1778, %v1776
        %v2243 = vpack.c.b16 %v1779, %v1777
        %v2244 = vpack.c.b16 %v1782, %v1780
        %v2245 = vpack.c.b16 %v1783, %v1781
        %v2246 = vpack.c.b16 %v1786, %v1784
        %v2247 = vpack.c.b16 %v1787, %v1785
        %v2248 = vpack.c.b16 %v1790, %v1788
        %v2249 = vpack.c.b16 %v1791, %v1789
        %v2250 = vpack.c.b16 %v1794, %v1792
        %v2251 = vpack.c.b16 %v1795, %v1793
        %v2252 = vpack.c.b16 %v1798, %v1796
        %v2253 = vpack.c.b16 %v1799, %v1797
        %v2254 = vpack.c.b16 %v1802, %v1800
        %v2255 = vpack.c.b16 %v1803, %v1801
        %v2256 = vpack.c.b16 %v1806, %v1804
        %v2257 = vpack.c.b16 %v1807, %v1805
        %v2258 = vpack.c.b16 %v1810, %v1808
        %v2259 = vpack.c.b16 %v1811, %v1809
        %v2260 = vpack.c.b16 %v1814, %v1812
        %v2261 = vpack.c.b16 %v1815, %v1813
        %v2262 = vpack.c.b16 %v1818, %v1816
        %v2263 = vpack.c.b16 %v1819, %v1817
        %v2264 = vpack.c.b16 %v1822, %v1820
        %v2265 = vpack.c.b16 %v1823, %v1821
        %v2266 = vpack.c.b16 %v1826, %v1824
        %v2267 = vpack.c.b16 %v1827, %v1825
        %v2268 = vpack.c.b16 %v1830, %v1828
        %v2269 = vpack.c.b16 %v1831, %v1829
        %v2270 = vpack.c.b16 %v1834, %v1832
        %v2271 = vpack.c.b16 %v1835, %v1833
        %v2272 = vpack.c.b16 %v1838, %v1836
        %v2273 = vpack.c.b16 %v1839, %v1837
        %v2274 = vpack.c.b16 %v1842, %v1840
        %v2275 = vpack.c.b16 %v1843, %v1841
        %v2276 = vpack.c.b16 %v1846, %v1844
        %v2277 = vpack.c.b16 %v1847, %v1845
        %v2278 = vpack.c.b16 %v1850, %v1848
        %v2279 = vpack.c.b16 %v1851, %v1849
        %v2280 = vpack.c.b16 %v1854, %v1852
        %v2281 = vpack.c.b16 %v1855, %v1853
        %v2282 = vpack.c.b16 %v1858, %v1856
        %v2283 = vpack.c.b16 %v1859, %v1857
        %v2284 = vpack.c.b16 %v1862, %v1860
        %v2285 = vpack.c.b16 %v1863, %v1861
        %v2286 = vpack.c.b16 %v1866, %v1864
        %v2287 = vpack.c.b16 %v1867, %v1865
        %v2288 = vpack.c.b16 %v1870, %v1868
        %v2289 = vpack.c.b16 %v1871, %v1869
        %v2290 = vpack.c.b16 %v1874, %v1872
        %v2291 = vpack.c.b16 %v1875, %v1873
        %v2292 = vpack.c.b16 %v1878, %v1876
        %v2293 = vpack.c.b16 %v1879, %v1877
        %v2294 = vpack.c.b16 %v1882, %v1880
        %v2295 = vpack.c.b16 %v1883, %v1881
        %v2296 = vpack.c.b16 %v1886, %v1884
        %v2297 = vpack.c.b16 %v1887, %v1885
        %v2298 = vpack.c.b16 %v1890, %v1888
        %v2299 = vpack.c.b16 %v1891, %v1889
        %v2300 = vpack.c.b16 %v1894, %v1892
        %v2301 = vpack.c.b16 %v1895, %v1893
        %v2302 = vpack.c.b16 %v1898, %v1896
        %v2303 = vpack.c.b16 %v1899, %v1897
        %v2304 = vpack.c.b16 %v1902, %v1900
        %v2305 = vpack.c.b16 %v1903, %v1901
        %v2306 = vpack.c.b16 %v1906, %v1904
        %v2307 = vpack.c.b16 %v1907, %v1905
        %v2308 = vpack.c.b16 %v1910, %v1908
        %v2309 = vpack.c.b16 %v1911, %v1909
        %v2310 = vpack.c.b16 %v1914, %v1912
        %v2311 = vpack.c.b16 %v1915, %v1913
        %v2312 = vpack.c.b16 %v1918, %v1916
        %v2313 = vpack.c.b16 %v1919, %v1917
        %v2314 = vpack.c.b16 %v1922, %v1920
        %v2315 = vpack.c.b16 %v1923, %v1921
        %v2316 = vpack.c.b16 %v1926, %v1924
        %v2317 = vpack.c.b16 %v1927, %v1925
        %v2318 = vpack.c.b16 %v1930, %v1928
        %v2319 = vpack.c.b16 %v1931, %v1929
        %v2320 = vpack.c.b16 %v1934, %v1932
        %v2321 = vpack.c.b16 %v1935, %v1933
        %v2322 = vpack.c.b16 %v1938, %v1936
        %v2323 = vpack.c.b16 %v1939, %v1937
        %2708 = vmatprep.subr.bf16.mxu0 %v1941
        %2709 = vmatpush1.bf16.msra.mxu0 %v1940
        %2710 = vmatprep.subr.bf16.mxu0 %v1943
        %2711 = vmatpush1.bf16.msra.mxu0 %v1942
        %2712 = vmatprep.subr.bf16.mxu0 %v1945
        %2713 = vmatpush1.bf16.msra.mxu0 %v1944
        %2714 = vmatprep.subr.bf16.mxu0 %v1947
        %2715 = vmatpush1.bf16.msra.mxu0 %v1946
        %2716 = vmatprep.subr.bf16.mxu0 %v1949
        %2717 = vmatpush1.bf16.msra.mxu0 %v1948
        %2718 = vmatprep.subr.bf16.mxu0 %v1951
        %2719 = vmatpush1.bf16.msra.mxu0 %v1950
        %2720 = vmatprep.subr.bf16.mxu0 %v1953
        %2721 = vmatpush1.bf16.msra.mxu0 %v1952
        %2722 = vmatprep.subr.bf16.mxu0 %v1955
        %2723 = vmatpush1.bf16.msra.mxu0 %v1954
        %2724 = vmatprep.subr.bf16.mxu0 %v1957
        %2725 = vmatpush1.bf16.msra.mxu0 %v1956
        %2726 = vmatprep.subr.bf16.mxu0 %v1959
        %2727 = vmatpush1.bf16.msra.mxu0 %v1958
        %2728 = vmatprep.subr.bf16.mxu0 %v1961
        %2729 = vmatpush1.bf16.msra.mxu0 %v1960
        %2730 = vmatprep.subr.bf16.mxu0 %v1963
        %2731 = vmatpush1.bf16.msra.mxu0 %v1962
        %2732 = vmatprep.subr.bf16.mxu0 %v1965
        %2733 = vmatpush1.bf16.msra.mxu0 %v1964
        %2734 = vmatprep.subr.bf16.mxu0 %v1967
        %2735 = vmatpush1.bf16.msra.mxu0 %v1966
        %2736 = vmatprep.subr.bf16.mxu0 %v1969
        %2737 = vmatpush1.bf16.msra.mxu0 %v1968
        %2738 = vmatprep.subr.bf16.mxu0 %v1971
        %2739 = vmatpush1.bf16.msra.mxu0 %v1970
        %2740 = vmatprep.mubr.bf16.mxu0 %v741
        %2741 = vmatmul.mubr.bf16.gmra.mrb[0].mxu0 %v740
        %v2742 = vpop.f32.mrb[0].mxu0
        %v2743 = vadd.f32 %v697, %v2742
        %v2744 = vpop.f32.mrb[0].mxu0
        %v2745 = vadd.f32 %v701, %v2744
        %v2746 = vpop.f32.mrb[0].mxu0
        %v2747 = vpop.f32.mrb[0].mxu0
        %2748 = vdwg.mxu0
        %2749 = vmatprep.subr.bf16.mxu0 %v1973
        %2750 = vmatpush1.bf16.msra.mxu0 %v1972
        %2751 = vmatprep.subr.bf16.mxu0 %v1975
        %2752 = vmatpush1.bf16.msra.mxu0 %v1974
        %2753 = vmatprep.subr.bf16.mxu0 %v1977
        %2754 = vmatpush1.bf16.msra.mxu0 %v1976
        %2755 = vmatprep.subr.bf16.mxu0 %v1979
        %2756 = vmatpush1.bf16.msra.mxu0 %v1978
        %2757 = vmatprep.subr.bf16.mxu0 %v1981
        %2758 = vmatpush1.bf16.msra.mxu0 %v1980
        %2759 = vmatprep.subr.bf16.mxu0 %v1983
        %2760 = vmatpush1.bf16.msra.mxu0 %v1982
        %2761 = vmatprep.subr.bf16.mxu0 %v1985
        %2762 = vmatpush1.bf16.msra.mxu0 %v1984
        %2763 = vmatprep.subr.bf16.mxu0 %v1987
        %2764 = vmatpush1.bf16.msra.mxu0 %v1986
        %2765 = vmatprep.subr.bf16.mxu0 %v1989
        %2766 = vmatpush1.bf16.msra.mxu0 %v1988
        %2767 = vmatprep.subr.bf16.mxu0 %v1991
        %2768 = vmatpush1.bf16.msra.mxu0 %v1990
        %2769 = vmatprep.subr.bf16.mxu0 %v1993
        %2770 = vmatpush1.bf16.msra.mxu0 %v1992
        %2771 = vmatprep.subr.bf16.mxu0 %v1995
        %2772 = vmatpush1.bf16.msra.mxu0 %v1994
        %2773 = vmatprep.subr.bf16.mxu0 %v1997
        %2774 = vmatpush1.bf16.msra.mxu0 %v1996
        %2775 = vmatprep.subr.bf16.mxu0 %v1999
        %2776 = vmatpush1.bf16.msra.mxu0 %v1998
        %2777 = vmatprep.subr.bf16.mxu0 %v2001
        %2778 = vmatpush1.bf16.msra.mxu0 %v2000
        %2779 = vmatprep.subr.bf16.mxu0 %v2003
        %2780 = vmatpush1.bf16.msra.mxu0 %v2002
        %2781 = vmatprep.mubr.bf16.mxu0 %v743
        %2782 = vmatmul.mubr.bf16.gmra.mrb[0].mxu0 %v742
        %v2783 = vpop.f32.mrb[0].mxu0
        %v2784 = vadd.f32 %v2743, %v2783
        %v2785 = vpop.f32.mrb[0].mxu0
        %v2786 = vadd.f32 %v2745, %v2785
        %v2787 = vpop.f32.mrb[0].mxu0
        %v2788 = vpop.f32.mrb[0].mxu0
        %2789 = vdwg.mxu0
        %2790 = vmatprep.subr.bf16.mxu0 %v2005
        %2791 = vmatpush1.bf16.msra.mxu0 %v2004
        %2792 = vmatprep.subr.bf16.mxu0 %v2007
        %2793 = vmatpush1.bf16.msra.mxu0 %v2006
        %2794 = vmatprep.subr.bf16.mxu0 %v2009
        %2795 = vmatpush1.bf16.msra.mxu0 %v2008
        %2796 = vmatprep.subr.bf16.mxu0 %v2011
        %2797 = vmatpush1.bf16.msra.mxu0 %v2010
        %2798 = vmatprep.subr.bf16.mxu0 %v2013
        %2799 = vmatpush1.bf16.msra.mxu0 %v2012
        %2800 = vmatprep.subr.bf16.mxu0 %v2015
        %2801 = vmatpush1.bf16.msra.mxu0 %v2014
        %2802 = vmatprep.subr.bf16.mxu0 %v2017
        %2803 = vmatpush1.bf16.msra.mxu0 %v2016
        %2804 = vmatprep.subr.bf16.mxu0 %v2019
        %2805 = vmatpush1.bf16.msra.mxu0 %v2018
        %2806 = vmatprep.subr.bf16.mxu0 %v2021
        %2807 = vmatpush1.bf16.msra.mxu0 %v2020
        %2808 = vmatprep.subr.bf16.mxu0 %v2023
        %2809 = vmatpush1.bf16.msra.mxu0 %v2022
        %2810 = vmatprep.subr.bf16.mxu0 %v2025
        %2811 = vmatpush1.bf16.msra.mxu0 %v2024
        %2812 = vmatprep.subr.bf16.mxu0 %v2027
        %2813 = vmatpush1.bf16.msra.mxu0 %v2026
        %2814 = vmatprep.subr.bf16.mxu0 %v2029
        %2815 = vmatpush1.bf16.msra.mxu0 %v2028
        %2816 = vmatprep.subr.bf16.mxu0 %v2031
        %2817 = vmatpush1.bf16.msra.mxu0 %v2030
        %2818 = vmatprep.subr.bf16.mxu0 %v2033
        %2819 = vmatpush1.bf16.msra.mxu0 %v2032
        %2820 = vmatprep.subr.bf16.mxu0 %v2035
        %2821 = vmatpush1.bf16.msra.mxu0 %v2034
        %2822 = vmatprep.mubr.bf16.mxu0 %v745
        %2823 = vmatmul.mubr.bf16.gmra.mrb[0].mxu0 %v744
        %v2824 = vpop.f32.mrb[0].mxu0
        %v2825 = vadd.f32 %v2784, %v2824
        %v2826 = vpop.f32.mrb[0].mxu0
        %v2827 = vadd.f32 %v2786, %v2826
        %v2828 = vpop.f32.mrb[0].mxu0
        %v2829 = vpop.f32.mrb[0].mxu0
        %2830 = vdwg.mxu0
        %2831 = vmatprep.subr.bf16.mxu0 %v2037
        %2832 = vmatpush1.bf16.msra.mxu0 %v2036
        %2833 = vmatprep.subr.bf16.mxu0 %v2039
        %2834 = vmatpush1.bf16.msra.mxu0 %v2038
        %2835 = vmatprep.subr.bf16.mxu0 %v2041
        %2836 = vmatpush1.bf16.msra.mxu0 %v2040
        %2837 = vmatprep.subr.bf16.mxu0 %v2043
        %2838 = vmatpush1.bf16.msra.mxu0 %v2042
        %2839 = vmatprep.subr.bf16.mxu0 %v2045
        %2840 = vmatpush1.bf16.msra.mxu0 %v2044
        %2841 = vmatprep.subr.bf16.mxu0 %v2047
        %2842 = vmatpush1.bf16.msra.mxu0 %v2046
        %2843 = vmatprep.subr.bf16.mxu0 %v2049
        %2844 = vmatpush1.bf16.msra.mxu0 %v2048
        %2845 = vmatprep.subr.bf16.mxu0 %v2051
        %2846 = vmatpush1.bf16.msra.mxu0 %v2050
        %2847 = vmatprep.subr.bf16.mxu0 %v2053
        %2848 = vmatpush1.bf16.msra.mxu0 %v2052
        %2849 = vmatprep.subr.bf16.mxu0 %v2055
        %2850 = vmatpush1.bf16.msra.mxu0 %v2054
        %2851 = vmatprep.subr.bf16.mxu0 %v2057
        %2852 = vmatpush1.bf16.msra.mxu0 %v2056
        %2853 = vmatprep.subr.bf16.mxu0 %v2059
        %2854 = vmatpush1.bf16.msra.mxu0 %v2058
        %2855 = vmatprep.subr.bf16.mxu0 %v2061
        %2856 = vmatpush1.bf16.msra.mxu0 %v2060
        %2857 = vmatprep.subr.bf16.mxu0 %v2063
        %2858 = vmatpush1.bf16.msra.mxu0 %v2062
        %2859 = vmatprep.subr.bf16.mxu0 %v2065
        %2860 = vmatpush1.bf16.msra.mxu0 %v2064
        %2861 = vmatprep.subr.bf16.mxu0 %v2067
        %2862 = vmatpush1.bf16.msra.mxu0 %v2066
        %2863 = vmatprep.mubr.bf16.mxu0 %v747
        %2864 = vmatmul.mubr.bf16.gmra.mrb[0].mxu0 %v746
        %v2865 = vpop.f32.mrb[0].mxu0
        %v2866 = vadd.f32 %v2825, %v2865
        %v2867 = vpop.f32.mrb[0].mxu0
        %v2868 = vadd.f32 %v2827, %v2867
        %v2869 = vpop.f32.mrb[0].mxu0
        %v2870 = vpop.f32.mrb[0].mxu0
        %2871 = vdwg.mxu0
        %2872 = vmatprep.subr.bf16.mxu0 %v2069
        %2873 = vmatpush1.bf16.msra.mxu0 %v2068
        %2874 = vmatprep.subr.bf16.mxu0 %v2071
        %2875 = vmatpush1.bf16.msra.mxu0 %v2070
        %2876 = vmatprep.subr.bf16.mxu0 %v2073
        %2877 = vmatpush1.bf16.msra.mxu0 %v2072
        %2878 = vmatprep.subr.bf16.mxu0 %v2075
        %2879 = vmatpush1.bf16.msra.mxu0 %v2074
        %2880 = vmatprep.subr.bf16.mxu0 %v2077
        %2881 = vmatpush1.bf16.msra.mxu0 %v2076
        %2882 = vmatprep.subr.bf16.mxu0 %v2079
        %2883 = vmatpush1.bf16.msra.mxu0 %v2078
        %2884 = vmatprep.subr.bf16.mxu0 %v2081
        %2885 = vmatpush1.bf16.msra.mxu0 %v2080
        %2886 = vmatprep.subr.bf16.mxu0 %v2083
        %2887 = vmatpush1.bf16.msra.mxu0 %v2082
        %2888 = vmatprep.subr.bf16.mxu0 %v2085
        %2889 = vmatpush1.bf16.msra.mxu0 %v2084
        %2890 = vmatprep.subr.bf16.mxu0 %v2087
        %2891 = vmatpush1.bf16.msra.mxu0 %v2086
        %2892 = vmatprep.subr.bf16.mxu0 %v2089
        %2893 = vmatpush1.bf16.msra.mxu0 %v2088
        %2894 = vmatprep.subr.bf16.mxu0 %v2091
        %2895 = vmatpush1.bf16.msra.mxu0 %v2090
        %2896 = vmatprep.subr.bf16.mxu0 %v2093
        %2897 = vmatpush1.bf16.msra.mxu0 %v2092
        %2898 = vmatprep.subr.bf16.mxu0 %v2095
        %2899 = vmatpush1.bf16.msra.mxu0 %v2094
        %2900 = vmatprep.subr.bf16.mxu0 %v2097
        %2901 = vmatpush1.bf16.msra.mxu0 %v2096
        %2902 = vmatprep.subr.bf16.mxu0 %v2099
        %2903 = vmatpush1.bf16.msra.mxu0 %v2098
        %2904 = vmatprep.mubr.bf16.mxu0 %v749
        %2905 = vmatmul.mubr.bf16.gmra.mrb[0].mxu0 %v748
        %v2906 = vpop.f32.mrb[0].mxu0
        %v2907 = vadd.f32 %v2866, %v2906
        %v2908 = vpop.f32.mrb[0].mxu0
        %v2909 = vadd.f32 %v2868, %v2908
        %v2910 = vpop.f32.mrb[0].mxu0
        %v2911 = vpop.f32.mrb[0].mxu0
        %2912 = vdwg.mxu0
        %2913 = vmatprep.subr.bf16.mxu0 %v2101
        %2914 = vmatpush1.bf16.msra.mxu0 %v2100
        %2915 = vmatprep.subr.bf16.mxu0 %v2103
        %2916 = vmatpush1.bf16.msra.mxu0 %v2102
        %2917 = vmatprep.subr.bf16.mxu0 %v2105
        %2918 = vmatpush1.bf16.msra.mxu0 %v2104
        %2919 = vmatprep.subr.bf16.mxu0 %v2107
        %2920 = vmatpush1.bf16.msra.mxu0 %v2106
        %2921 = vmatprep.subr.bf16.mxu0 %v2109
        %2922 = vmatpush1.bf16.msra.mxu0 %v2108
        %2923 = vmatprep.subr.bf16.mxu0 %v2111
        %2924 = vmatpush1.bf16.msra.mxu0 %v2110
        %2925 = vmatprep.subr.bf16.mxu0 %v2113
        %2926 = vmatpush1.bf16.msra.mxu0 %v2112
        %2927 = vmatprep.subr.bf16.mxu0 %v2115
        %2928 = vmatpush1.bf16.msra.mxu0 %v2114
        %2929 = vmatprep.subr.bf16.mxu0 %v2117
        %2930 = vmatpush1.bf16.msra.mxu0 %v2116
        %2931 = vmatprep.subr.bf16.mxu0 %v2119
        %2932 = vmatpush1.bf16.msra.mxu0 %v2118
        %2933 = vmatprep.subr.bf16.mxu0 %v2121
        %2934 = vmatpush1.bf16.msra.mxu0 %v2120
        %2935 = vmatprep.subr.bf16.mxu0 %v2123
        %2936 = vmatpush1.bf16.msra.mxu0 %v2122
        %2937 = vmatprep.subr.bf16.mxu0 %v2125
        %2938 = vmatpush1.bf16.msra.mxu0 %v2124
        %2939 = vmatprep.subr.bf16.mxu0 %v2127
        %2940 = vmatpush1.bf16.msra.mxu0 %v2126
        %2941 = vmatprep.subr.bf16.mxu0 %v2129
        %2942 = vmatpush1.bf16.msra.mxu0 %v2128
        %2943 = vmatprep.subr.bf16.mxu0 %v2131
        %2944 = vmatpush1.bf16.msra.mxu0 %v2130
        %2945 = vmatprep.mubr.bf16.mxu0 %v751
        %2946 = vmatmul.mubr.bf16.gmra.mrb[0].mxu0 %v750
        %v2947 = vpop.f32.mrb[0].mxu0
        %v2948 = vadd.f32 %v2907, %v2947
        %v2949 = vpop.f32.mrb[0].mxu0
        %v2950 = vadd.f32 %v2909, %v2949
        %v2951 = vpop.f32.mrb[0].mxu0
        %v2952 = vpop.f32.mrb[0].mxu0
        %2953 = vdwg.mxu0
        %2954 = vmatprep.subr.bf16.mxu0 %v2133
        %2955 = vmatpush1.bf16.msra.mxu0 %v2132
        %2956 = vmatprep.subr.bf16.mxu0 %v2135
        %2957 = vmatpush1.bf16.msra.mxu0 %v2134
        %2958 = vmatprep.subr.bf16.mxu0 %v2137
        %2959 = vmatpush1.bf16.msra.mxu0 %v2136
        %2960 = vmatprep.subr.bf16.mxu0 %v2139
        %2961 = vmatpush1.bf16.msra.mxu0 %v2138
        %2962 = vmatprep.subr.bf16.mxu0 %v2141
        %2963 = vmatpush1.bf16.msra.mxu0 %v2140
        %2964 = vmatprep.subr.bf16.mxu0 %v2143
        %2965 = vmatpush1.bf16.msra.mxu0 %v2142
        %2966 = vmatprep.subr.bf16.mxu0 %v2145
        %2967 = vmatpush1.bf16.msra.mxu0 %v2144
        %2968 = vmatprep.subr.bf16.mxu0 %v2147
        %2969 = vmatpush1.bf16.msra.mxu0 %v2146
        %2970 = vmatprep.subr.bf16.mxu0 %v2149
        %2971 = vmatpush1.bf16.msra.mxu0 %v2148
        %2972 = vmatprep.subr.bf16.mxu0 %v2151
        %2973 = vmatpush1.bf16.msra.mxu0 %v2150
        %2974 = vmatprep.subr.bf16.mxu0 %v2153
        %2975 = vmatpush1.bf16.msra.mxu0 %v2152
        %2976 = vmatprep.subr.bf16.mxu0 %v2155
        %2977 = vmatpush1.bf16.msra.mxu0 %v2154
        %2978 = vmatprep.subr.bf16.mxu0 %v2157
        %2979 = vmatpush1.bf16.msra.mxu0 %v2156
        %2980 = vmatprep.subr.bf16.mxu0 %v2159
        %2981 = vmatpush1.bf16.msra.mxu0 %v2158
        %2982 = vmatprep.subr.bf16.mxu0 %v2161
        %2983 = vmatpush1.bf16.msra.mxu0 %v2160
        %2984 = vmatprep.subr.bf16.mxu0 %v2163
        %2985 = vmatpush1.bf16.msra.mxu0 %v2162
        %2986 = vmatprep.mubr.bf16.mxu0 %v753
        %2987 = vmatmul.mubr.bf16.gmra.mrb[0].mxu0 %v752
        %v2988 = vpop.f32.mrb[0].mxu0
        %v2989 = vadd.f32 %v2948, %v2988
        %v2990 = vpop.f32.mrb[0].mxu0
        %v2991 = vadd.f32 %v2950, %v2990
        %v2992 = vpop.f32.mrb[0].mxu0
        %v2993 = vpop.f32.mrb[0].mxu0
        %2994 = vdwg.mxu0
        %2995 = vmatprep.subr.bf16.mxu0 %v2165
        %2996 = vmatpush1.bf16.msra.mxu0 %v2164
        %2997 = vmatprep.subr.bf16.mxu0 %v2167
        %2998 = vmatpush1.bf16.msra.mxu0 %v2166
        %2999 = vmatprep.subr.bf16.mxu0 %v2169
        %3000 = vmatpush1.bf16.msra.mxu0 %v2168
        %3001 = vmatprep.subr.bf16.mxu0 %v2171
        %3002 = vmatpush1.bf16.msra.mxu0 %v2170
        %3003 = vmatprep.subr.bf16.mxu0 %v2173
        %3004 = vmatpush1.bf16.msra.mxu0 %v2172
        %3005 = vmatprep.subr.bf16.mxu0 %v2175
        %3006 = vmatpush1.bf16.msra.mxu0 %v2174
        %3007 = vmatprep.subr.bf16.mxu0 %v2177
        %3008 = vmatpush1.bf16.msra.mxu0 %v2176
        %3009 = vmatprep.subr.bf16.mxu0 %v2179
        %3010 = vmatpush1.bf16.msra.mxu0 %v2178
        %3011 = vmatprep.subr.bf16.mxu0 %v2181
        %3012 = vmatpush1.bf16.msra.mxu0 %v2180
        %3013 = vmatprep.subr.bf16.mxu0 %v2183
        %3014 = vmatpush1.bf16.msra.mxu0 %v2182
        %3015 = vmatprep.subr.bf16.mxu0 %v2185
        %3016 = vmatpush1.bf16.msra.mxu0 %v2184
        %3017 = vmatprep.subr.bf16.mxu0 %v2187
        %3018 = vmatpush1.bf16.msra.mxu0 %v2186
        %3019 = vmatprep.subr.bf16.mxu0 %v2189
        %3020 = vmatpush1.bf16.msra.mxu0 %v2188
        %3021 = vmatprep.subr.bf16.mxu0 %v2191
        %3022 = vmatpush1.bf16.msra.mxu0 %v2190
        %3023 = vmatprep.subr.bf16.mxu0 %v2193
        %3024 = vmatpush1.bf16.msra.mxu0 %v2192
        %3025 = vmatprep.subr.bf16.mxu0 %v2195
        %3026 = vmatpush1.bf16.msra.mxu0 %v2194
        %3027 = vmatprep.mubr.bf16.mxu0 %v755
        %3028 = vmatmul.mubr.bf16.gmra.mrb[0].mxu0 %v754
        %v3029 = vpop.f32.mrb[0].mxu0
        %v3030 = vadd.f32 %v2989, %v3029
        %v3031 = vpop.f32.mrb[0].mxu0
        %v3032 = vadd.f32 %v2991, %v3031
        %v3033 = vpop.f32.mrb[0].mxu0
        %v3034 = vpop.f32.mrb[0].mxu0
        %3035 = vdwg.mxu0
        %3036 = vmatprep.subr.bf16.mxu0 %v2197
        %3037 = vmatpush1.bf16.msra.mxu0 %v2196
        %3038 = vmatprep.subr.bf16.mxu0 %v2199
        %3039 = vmatpush1.bf16.msra.mxu0 %v2198
        %3040 = vmatprep.subr.bf16.mxu0 %v2201
        %3041 = vmatpush1.bf16.msra.mxu0 %v2200
        %3042 = vmatprep.subr.bf16.mxu0 %v2203
        %3043 = vmatpush1.bf16.msra.mxu0 %v2202
        %3044 = vmatprep.subr.bf16.mxu0 %v2205
        %3045 = vmatpush1.bf16.msra.mxu0 %v2204
        %3046 = vmatprep.subr.bf16.mxu0 %v2207
        %3047 = vmatpush1.bf16.msra.mxu0 %v2206
        %3048 = vmatprep.subr.bf16.mxu0 %v2209
        %3049 = vmatpush1.bf16.msra.mxu0 %v2208
        %3050 = vmatprep.subr.bf16.mxu0 %v2211
        %3051 = vmatpush1.bf16.msra.mxu0 %v2210
        %3052 = vmatprep.subr.bf16.mxu0 %v2213
        %3053 = vmatpush1.bf16.msra.mxu0 %v2212
        %3054 = vmatprep.subr.bf16.mxu0 %v2215
        %3055 = vmatpush1.bf16.msra.mxu0 %v2214
        %3056 = vmatprep.subr.bf16.mxu0 %v2217
        %3057 = vmatpush1.bf16.msra.mxu0 %v2216
        %3058 = vmatprep.subr.bf16.mxu0 %v2219
        %3059 = vmatpush1.bf16.msra.mxu0 %v2218
        %3060 = vmatprep.subr.bf16.mxu0 %v2221
        %3061 = vmatpush1.bf16.msra.mxu0 %v2220
        %3062 = vmatprep.subr.bf16.mxu0 %v2223
        %3063 = vmatpush1.bf16.msra.mxu0 %v2222
        %3064 = vmatprep.subr.bf16.mxu0 %v2225
        %3065 = vmatpush1.bf16.msra.mxu0 %v2224
        %3066 = vmatprep.subr.bf16.mxu0 %v2227
        %3067 = vmatpush1.bf16.msra.mxu0 %v2226
        %3068 = vmatprep.mubr.bf16.mxu0 %v757
        %3069 = vmatmul.mubr.bf16.gmra.mrb[0].mxu0 %v756
        %v3070 = vpop.f32.mrb[0].mxu0
        %v3071 = vadd.f32 %v3030, %v3070
        %v3072 = vpop.f32.mrb[0].mxu0
        %v3073 = vadd.f32 %v3032, %v3072
        %v3074 = vpop.f32.mrb[0].mxu0
        %v3075 = vpop.f32.mrb[0].mxu0
        %3076 = vdwg.mxu0
        %3077 = vmatprep.subr.bf16.mxu0 %v2229
        %3078 = vmatpush1.bf16.msra.mxu0 %v2228
        %3079 = vmatprep.subr.bf16.mxu0 %v2231
        %3080 = vmatpush1.bf16.msra.mxu0 %v2230
        %3081 = vmatprep.subr.bf16.mxu0 %v2233
        %3082 = vmatpush1.bf16.msra.mxu0 %v2232
        %3083 = vmatprep.subr.bf16.mxu0 %v2235
        %3084 = vmatpush1.bf16.msra.mxu0 %v2234
        %3085 = vmatprep.subr.bf16.mxu0 %v2237
        %3086 = vmatpush1.bf16.msra.mxu0 %v2236
        %3087 = vmatprep.subr.bf16.mxu0 %v2239
        %3088 = vmatpush1.bf16.msra.mxu0 %v2238
        %3089 = vmatprep.subr.bf16.mxu0 %v2241
        %3090 = vmatpush1.bf16.msra.mxu0 %v2240
        %3091 = vmatprep.subr.bf16.mxu0 %v2243
        %3092 = vmatpush1.bf16.msra.mxu0 %v2242
        %3093 = vmatprep.subr.bf16.mxu0 %v2245
        %3094 = vmatpush1.bf16.msra.mxu0 %v2244
        %3095 = vmatprep.subr.bf16.mxu0 %v2247
        %3096 = vmatpush1.bf16.msra.mxu0 %v2246
        %3097 = vmatprep.subr.bf16.mxu0 %v2249
        %3098 = vmatpush1.bf16.msra.mxu0 %v2248
        %3099 = vmatprep.subr.bf16.mxu0 %v2251
        %3100 = vmatpush1.bf16.msra.mxu0 %v2250
        %3101 = vmatprep.subr.bf16.mxu0 %v2253
        %3102 = vmatpush1.bf16.msra.mxu0 %v2252
        %3103 = vmatprep.subr.bf16.mxu0 %v2255
        %3104 = vmatpush1.bf16.msra.mxu0 %v2254
        %3105 = vmatprep.subr.bf16.mxu0 %v2257
        %3106 = vmatpush1.bf16.msra.mxu0 %v2256
        %3107 = vmatprep.subr.bf16.mxu0 %v2259
        %3108 = vmatpush1.bf16.msra.mxu0 %v2258
        %3109 = vmatprep.mubr.bf16.mxu0 %v759
        %3110 = vmatmul.mubr.bf16.gmra.mrb[0].mxu0 %v758
        %v3111 = vpop.f32.mrb[0].mxu0
        %v3112 = vadd.f32 %v3071, %v3111
        %v3113 = vpop.f32.mrb[0].mxu0
        %v3114 = vadd.f32 %v3073, %v3113
        %v3115 = vpop.f32.mrb[0].mxu0
        %v3116 = vpop.f32.mrb[0].mxu0
        %3117 = vdwg.mxu0
        %3118 = vmatprep.subr.bf16.mxu0 %v2261
        %3119 = vmatpush1.bf16.msra.mxu0 %v2260
        %3120 = vmatprep.subr.bf16.mxu0 %v2263
        %3121 = vmatpush1.bf16.msra.mxu0 %v2262
        %3122 = vmatprep.subr.bf16.mxu0 %v2265
        %3123 = vmatpush1.bf16.msra.mxu0 %v2264
        %3124 = vmatprep.subr.bf16.mxu0 %v2267
        %3125 = vmatpush1.bf16.msra.mxu0 %v2266
        %3126 = vmatprep.subr.bf16.mxu0 %v2269
        %3127 = vmatpush1.bf16.msra.mxu0 %v2268
        %3128 = vmatprep.subr.bf16.mxu0 %v2271
        %3129 = vmatpush1.bf16.msra.mxu0 %v2270
        %3130 = vmatprep.subr.bf16.mxu0 %v2273
        %3131 = vmatpush1.bf16.msra.mxu0 %v2272
        %3132 = vmatprep.subr.bf16.mxu0 %v2275
        %3133 = vmatpush1.bf16.msra.mxu0 %v2274
        %3134 = vmatprep.subr.bf16.mxu0 %v2277
        %3135 = vmatpush1.bf16.msra.mxu0 %v2276
        %3136 = vmatprep.subr.bf16.mxu0 %v2279
        %3137 = vmatpush1.bf16.msra.mxu0 %v2278
        %3138 = vmatprep.subr.bf16.mxu0 %v2281
        %3139 = vmatpush1.bf16.msra.mxu0 %v2280
        %3140 = vmatprep.subr.bf16.mxu0 %v2283
        %3141 = vmatpush1.bf16.msra.mxu0 %v2282
        %3142 = vmatprep.subr.bf16.mxu0 %v2285
        %3143 = vmatpush1.bf16.msra.mxu0 %v2284
        %3144 = vmatprep.subr.bf16.mxu0 %v2287
        %3145 = vmatpush1.bf16.msra.mxu0 %v2286
        %3146 = vmatprep.subr.bf16.mxu0 %v2289
        %3147 = vmatpush1.bf16.msra.mxu0 %v2288
        %3148 = vmatprep.subr.bf16.mxu0 %v2291
        %3149 = vmatpush1.bf16.msra.mxu0 %v2290
        %3150 = vmatprep.mubr.bf16.mxu0 %v761
        %3151 = vmatmul.mubr.bf16.gmra.mrb[0].mxu0 %v760
        %v3152 = vpop.f32.mrb[0].mxu0
        %v3153 = vadd.f32 %v3112, %v3152
        %v3154 = vpop.f32.mrb[0].mxu0
        %v3155 = vadd.f32 %v3114, %v3154
        %v3156 = vpop.f32.mrb[0].mxu0
        %v3157 = vpop.f32.mrb[0].mxu0
        %3158 = vdwg.mxu0
        %3159 = vmatprep.subr.bf16.mxu0 %v2293
        %3160 = vmatpush1.bf16.msra.mxu0 %v2292
        %3161 = vmatprep.subr.bf16.mxu0 %v2295
        %3162 = vmatpush1.bf16.msra.mxu0 %v2294
        %3163 = vmatprep.subr.bf16.mxu0 %v2297
        %3164 = vmatpush1.bf16.msra.mxu0 %v2296
        %3165 = vmatprep.subr.bf16.mxu0 %v2299
        %3166 = vmatpush1.bf16.msra.mxu0 %v2298
        %3167 = vmatprep.subr.bf16.mxu0 %v2301
        %3168 = vmatpush1.bf16.msra.mxu0 %v2300
        %3169 = vmatprep.subr.bf16.mxu0 %v2303
        %3170 = vmatpush1.bf16.msra.mxu0 %v2302
        %3171 = vmatprep.subr.bf16.mxu0 %v2305
        %3172 = vmatpush1.bf16.msra.mxu0 %v2304
        %3173 = vmatprep.subr.bf16.mxu0 %v2307
        %3174 = vmatpush1.bf16.msra.mxu0 %v2306
        %3175 = vmatprep.subr.bf16.mxu0 %v2309
        %3176 = vmatpush1.bf16.msra.mxu0 %v2308
        %3177 = vmatprep.subr.bf16.mxu0 %v2311
        %3178 = vmatpush1.bf16.msra.mxu0 %v2310
        %3179 = vmatprep.subr.bf16.mxu0 %v2313
        %3180 = vmatpush1.bf16.msra.mxu0 %v2312
        %3181 = vmatprep.subr.bf16.mxu0 %v2315
        %3182 = vmatpush1.bf16.msra.mxu0 %v2314
        %3183 = vmatprep.subr.bf16.mxu0 %v2317
        %3184 = vmatpush1.bf16.msra.mxu0 %v2316
        %3185 = vmatprep.subr.bf16.mxu0 %v2319
        %3186 = vmatpush1.bf16.msra.mxu0 %v2318
        %3187 = vmatprep.subr.bf16.mxu0 %v2321
        %3188 = vmatpush1.bf16.msra.mxu0 %v2320
        %3189 = vmatprep.subr.bf16.mxu0 %v2323
        %3190 = vmatpush1.bf16.msra.mxu0 %v2322
        %3191 = vmatprep.mubr.bf16.mxu0 %v763
        %3192 = vmatmul.mubr.bf16.gmra.mrb[0].mxu0 %v762
        %v3193 = vpop.f32.mrb[0].mxu0
        %v3194 = vadd.f32 %v3153, %v3193
        %v3195 = vpop.f32.mrb[0].mxu0
        %v3196 = vadd.f32 %v3155, %v3195
        %v3197 = vpop.f32.mrb[0].mxu0
        %v3198 = vpop.f32.mrb[0].mxu0
        %3199 = vdwg.mxu0
        %v3200 = vmax.f32 %v3194, 0.0
        %v3201 = vmax.f32 %v3196, 0.0
        %v3202 = vpack.c.bf16 %v3200, %v3200
        %v3203 = vpack.c.bf16 %v3201, %v3201
        %v3204 = vld [vmem:[#allocation8] sm:$0xf]
        %v3205 = vld [vmem:[#allocation8 + $0x4] sm:$0xf]
        %v3206 = vld [vmem:[#allocation8 + $0x8] sm:$0xf]
        %v3207 = vld [vmem:[#allocation8 + $0xc] sm:$0xf]
        %v3208 = vld [vmem:[#allocation8 + $0x10] sm:$0xf]
        %v3209 = vld [vmem:[#allocation8 + $0x14] sm:$0xf]
        %v3210 = vld [vmem:[#allocation8 + $0x18] sm:$0xf]
        %v3211 = vld [vmem:[#allocation8 + $0x1c] sm:$0xf]
        %v3212 = vld [vmem:[#allocation8 + $0x20] sm:$0xf]
        %v3213 = vld [vmem:[#allocation8 + $0x24] sm:$0xf]
        %v3214 = vld [vmem:[#allocation8 + $0x28] sm:$0xf]
        %v3215 = vld [vmem:[#allocation8 + $0x2c] sm:$0xf]
        %v3216 = vld [vmem:[#allocation8 + $0x30] sm:$0xf]
        %v3217 = vld [vmem:[#allocation8 + $0x34] sm:$0xf]
        %v3218 = vld [vmem:[#allocation8 + $0x38] sm:$0xf]
        %v3219 = vld [vmem:[#allocation8 + $0x3c] sm:$0xf]
        %v3220 = vld [vmem:[#allocation8 + $0x40] sm:$0xf]
        %v3221 = vld [vmem:[#allocation8 + $0x44] sm:$0xf]
        %v3222 = vld [vmem:[#allocation8 + $0x48] sm:$0xf]
        %v3223 = vld [vmem:[#allocation8 + $0x4c] sm:$0xf]
        %v3224 = vld [vmem:[#allocation8 + $0x50] sm:$0xf]
        %v3225 = vld [vmem:[#allocation8 + $0x54] sm:$0xf]
        %v3226 = vld [vmem:[#allocation8 + $0x58] sm:$0xf]
        %v3227 = vld [vmem:[#allocation8 + $0x5c] sm:$0xf]
        %v3228 = vld [vmem:[#allocation8 + $0x60] sm:$0xf]
        %v3229 = vld [vmem:[#allocation8 + $0x64] sm:$0xf]
        %v3230 = vld [vmem:[#allocation8 + $0x68] sm:$0xf]
        %v3231 = vld [vmem:[#allocation8 + $0x6c] sm:$0xf]
        %v3232 = vld [vmem:[#allocation8 + $0x70] sm:$0xf]
        %v3233 = vld [vmem:[#allocation8 + $0x74] sm:$0xf]
        %v3234 = vld [vmem:[#allocation8 + $0x78] sm:$0xf]
        %v3235 = vld [vmem:[#allocation8 + $0x7c] sm:$0xf]
        %v3236 = vld [vmem:[#allocation10] sm:$0x1]
        %v3238 = vlaneseq
        %v3239 = vshrl.u32 %v3238, 7
        %v3240 = vsub.s32 0, %v3239
        %v3241 = vrot.slane %v3236, %v3240
        %v3275 = vunpack.c.l.b16 %v3204
        %v3276 = vunpack.c.l.b16 %v3205
        %v3277 = vunpack.c.l.b16 %v3206
        %v3278 = vunpack.c.l.b16 %v3207
        %v3279 = vunpack.c.l.b16 %v3208
        %v3280 = vunpack.c.l.b16 %v3209
        %v3281 = vunpack.c.l.b16 %v3210
        %v3282 = vunpack.c.l.b16 %v3211
        %v3283 = vunpack.c.l.b16 %v3212
        %v3284 = vunpack.c.l.b16 %v3213
        %v3285 = vunpack.c.l.b16 %v3214
        %v3286 = vunpack.c.l.b16 %v3215
        %v3287 = vunpack.c.l.b16 %v3216
        %v3288 = vunpack.c.l.b16 %v3217
        %v3289 = vunpack.c.l.b16 %v3218
        %v3290 = vunpack.c.l.b16 %v3219
        %v3291 = vunpack.c.l.b16 %v3220
        %v3292 = vunpack.c.l.b16 %v3221
        %v3293 = vunpack.c.l.b16 %v3222
        %v3294 = vunpack.c.l.b16 %v3223
        %v3295 = vunpack.c.l.b16 %v3224
        %v3296 = vunpack.c.l.b16 %v3225
        %v3297 = vunpack.c.l.b16 %v3226
        %v3298 = vunpack.c.l.b16 %v3227
        %v3299 = vunpack.c.l.b16 %v3228
        %v3300 = vunpack.c.l.b16 %v3229
        %v3301 = vunpack.c.l.b16 %v3230
        %v3302 = vunpack.c.l.b16 %v3231
        %v3303 = vunpack.c.l.b16 %v3232
        %v3304 = vunpack.c.l.b16 %v3233
        %v3305 = vunpack.c.l.b16 %v3234
        %v3306 = vunpack.c.l.b16 %v3235
        %v3307 = vpack.c.b16 %v3276, %v3275
        %v3308 = vpack.c.b16 %v3278, %v3277
        %v3309 = vpack.c.b16 %v3280, %v3279
        %v3310 = vpack.c.b16 %v3282, %v3281
        %v3311 = vpack.c.b16 %v3284, %v3283
        %v3312 = vpack.c.b16 %v3286, %v3285
        %v3313 = vpack.c.b16 %v3288, %v3287
        %v3314 = vpack.c.b16 %v3290, %v3289
        %v3315 = vpack.c.b16 %v3292, %v3291
        %v3316 = vpack.c.b16 %v3294, %v3293
        %v3317 = vpack.c.b16 %v3296, %v3295
        %v3318 = vpack.c.b16 %v3298, %v3297
        %v3319 = vpack.c.b16 %v3300, %v3299
        %v3320 = vpack.c.b16 %v3302, %v3301
        %v3321 = vpack.c.b16 %v3304, %v3303
        %v3322 = vpack.c.b16 %v3306, %v3305
        %3339 = vmatprep.subr.bf16.mxu0 0
        %3340 = vmatpush1.bf16.msra.mxu0 %v3307
        %3341 = vmatprep.subr.bf16.mxu0 0
        %3342 = vmatpush1.bf16.msra.mxu0 %v3308
        %3343 = vmatprep.subr.bf16.mxu0 0
        %3344 = vmatpush1.bf16.msra.mxu0 %v3309
        %3345 = vmatprep.subr.bf16.mxu0 0
        %3346 = vmatpush1.bf16.msra.mxu0 %v3310
        %3347 = vmatprep.subr.bf16.mxu0 0
        %3348 = vmatpush1.bf16.msra.mxu0 %v3311
        %3349 = vmatprep.subr.bf16.mxu0 0
        %3350 = vmatpush1.bf16.msra.mxu0 %v3312
        %3351 = vmatprep.subr.bf16.mxu0 0
        %3352 = vmatpush1.bf16.msra.mxu0 %v3313
        %3353 = vmatprep.subr.bf16.mxu0 0
        %3354 = vmatpush1.bf16.msra.mxu0 %v3314
        %3355 = vmatprep.subr.bf16.mxu0 0
        %3356 = vmatpush1.bf16.msra.mxu0 %v3315
        %3357 = vmatprep.subr.bf16.mxu0 0
        %3358 = vmatpush1.bf16.msra.mxu0 %v3316
        %3359 = vmatprep.subr.bf16.mxu0 0
        %3360 = vmatpush1.bf16.msra.mxu0 %v3317
        %3361 = vmatprep.subr.bf16.mxu0 0
        %3362 = vmatpush1.bf16.msra.mxu0 %v3318
        %3363 = vmatprep.subr.bf16.mxu0 0
        %3364 = vmatpush1.bf16.msra.mxu0 %v3319
        %3365 = vmatprep.subr.bf16.mxu0 0
        %3366 = vmatpush1.bf16.msra.mxu0 %v3320
        %3367 = vmatprep.subr.bf16.mxu0 0
        %3368 = vmatpush1.bf16.msra.mxu0 %v3321
        %3369 = vmatprep.subr.bf16.mxu0 0
        %3370 = vmatpush1.bf16.msra.mxu0 %v3322
        %3371 = vmatprep.mubr.bf16.mxu0 %v3203
        %3372 = vmatmul.mubr.bf16.gmra.mrb[0].mxu0 %v3202
        %v3373 = vpop.f32.mrb[0].mxu0
        %v3374 = vadd.f32 %v3241, %v3373
        %v3375 = vpop.f32.mrb[0].mxu0
        %v3376 = vpop.f32.mrb[0].mxu0
        %v3377 = vpop.f32.mrb[0].mxu0
        %3378 = vdwg.mxu0
        %v3379 = vmax.f32 %v3374, 0.0
        %3380 = vst [vmem:[%s294] sm:$0xff] %v3379
        %s3381 = sand.u32 %s142, 1
        %s3382 = scalar_lea.sflag [#allocation4], %s3381
        %s3383 = sand.u32 %s142, 1
        %s3384 = smul.addr %s3383, 8
        %s3385 = scalar_lea.vmem [#allocation11], %s3384
        // Predicated region
        $region61: #{tpu_custom_call.1} parent=39 // pred_check
          %p3386 = pneg %p152
        $region62: #{tpu_custom_call.1} parent=39 // pred_check_branch
          %3388 = sbr.rel (%p3386) target = $region64
        $region63: #{tpu_custom_call.1} parent=39 // pred_region
          %s3390 = ssub.s32 128, 128
          %3391 = vsyncadd %s3382, %s3390
          %s3392 = smul.addr %s24, 128
          %s3393 = scalar_lea.hbm %s5, %s3392
          %s3395 = sshll.u32 %s3385, 4
          %s3396 = int_to_ptr.vmem [resolvable:$true] %s3395
          %3398 = dma.vmem_to_hbm [thread:$0]  %s3396, 128, %s3393, %s3382
        $region64: #{tpu_custom_call.1} parent=39 // pred_fallthru
          _
      $region40: #{tpu_custom_call.1} parent=5 // pred_fallthru
        _
      %p3399 = scmp.le.s32.totalorder 2, %s19
      // Predicated region
      $region65: #{tpu_custom_call.1} parent=5 // pred_check
        %p3400 = pneg %p3399
      $region66: #{tpu_custom_call.1} parent=5 // pred_check_branch
        %3402 = sbr.rel (%p3400) target = $region68
      $region67: #{tpu_custom_call.1} parent=5 // pred_region
        %s3403 = ssub.s32 %s19, 2
        // Predicated region
        $region69: #{tpu_custom_call.1} parent=67 // pred_check
          %p3404 = pneg %p158
        $region70: #{tpu_custom_call.1} parent=67 // pred_check_branch
          %3406 = sbr.rel (%p3404) target = $region72
        $region71: #{tpu_custom_call.1} parent=67 // pred_region
          %s3407 = sand.u32 %s143, 1
          %s3408 = scalar_lea.sflag [#allocation4], %s3407
          %s3409 = sand.u32 %s143, 1
          %s3410 = smul.addr %s3409, 8
          %s3411 = scalar_lea.vmem [#allocation11], %s3410
          %3412 = dma.done %s3408, 128
        $region72: #{tpu_custom_call.1} parent=67 // pred_fallthru
          _
      $region68: #{tpu_custom_call.1} parent=5 // pred_fallthru
        _
    $region6: #{tpu_custom_call.1} parent=1 // loop_footer
      %s23 = sadd.s32 1, %s19
    $region7: #{tpu_custom_call.1} parent=1 // loop_footer_branch
      %18 = sbr.rel target = $region3
    $region8: #{tpu_custom_call.1} parent=1 // loop_exit
      _
    %3413 = vsyncpa [#allocation3], 1
    %s3414 = scalar_lea.sflag [#allocation3], 1
    %3415 = vsyncpa %s3414, 1
    %3416 = vsyncpa [#allocation6], 1
    %3417 = vsyncpa [#allocation9], 1
    %3418 = vsyncpa [#allocation4], 1
    %s3419 = scalar_lea.sflag [#allocation4], 1
    %3420 = vsyncpa %s3419, 1

</llo_original>
